<compile_context>
chip_gen: v7x
topology: tpu7x:2x2x1
jax: 0.10.0
libtpu: 0.0.40
codegen_flags: <defaults>
</compile_context>

<pallas_src>
import functools

import jax
import jax.numpy as jnp
from jax.experimental import pallas as pl
from jax.experimental.pallas import tpu as pltpu

# ---------------- config (small shapes consistent with the module) ----------
SEQ = 8
BATCH = 2
OBS = 16            # input_space = (16,)
FEAT = 64           # headless MLP output size
HIDDEN = 32         # lstm hidden_size
N_LAYERS = 2        # n_lstm_layers
OUT = 4             # sum(output_space)
G4 = 4 * HIDDEN     # 128 = one lane width
DTYPE = jnp.float32

# ---- packed-slab row offsets (all sublane-aligned, multiples of 8) ----------
_MLP_W1 = 0
_MLP_B1 = OBS                       # 16
_MLP_W2 = OBS + 8                   # 24
_MLP_B2 = OBS + 8 + FEAT            # 88
_MLP_ROWS = OBS + 16 + FEAT         # 96

_L0_WIH = 0
_L0_WHH = FEAT                      # 64
_L0_B = FEAT + HIDDEN               # 96
_L1_WIH = _L0_B + 8                 # 104
_L1_WHH = _L1_WIH + HIDDEN          # 136
_L1_B = _L1_WHH + HIDDEN            # 168
_FC_W = _L1_B + 8                   # 176
_FC_B = _FC_W + HIDDEN              # 208
_W_ROWS = _FC_B + 8                 # 216


def _mish(x):
    # mish(x) = x * tanh(softplus(x)); numerically-safe softplus (PyTorch threshold 20)
    sp = jnp.where(x > 20.0, x, jnp.log1p(jnp.exp(jnp.minimum(x, 20.0))))
    return x * jnp.tanh(sp)


# ---------------- single fused Pallas kernel ---------------------------------

def _fused_forward_kernel(x_ref, mlp_ref, w_ref, out_ref, seq0, seq1, *, batch):
    H = HIDDEN
    B = batch
    TB = x_ref.shape[0]
    T = TB // B

    # ---- feature MLP on all T*B rows at once --------------------------------
    w1 = mlp_ref[_MLP_W1:_MLP_W1 + OBS, :]
    b1 = mlp_ref[_MLP_B1:_MLP_B1 + 1, :]
    w2 = mlp_ref[_MLP_W2:_MLP_W2 + FEAT, :]
    b2 = mlp_ref[_MLP_B2:_MLP_B2 + 1, :]
    f = _mish(jnp.dot(x_ref[...], w1, preferred_element_type=jnp.float32) + b1)
    f = _mish(jnp.dot(f, w2, preferred_element_type=jnp.float32) + b2)   # (T*B, FEAT)

    # lane mask: gates stored [i, f, o | g] -> sigmoid on lanes 0:96, tanh on 96:128
    lane = jax.lax.broadcasted_iota(jnp.int32, (B, G4), 1)
    sig_mask = lane < 3 * H

    def lstm_layer(inp, wih, whh, bias, out_scratch):
        # Hoisted lane-dense input projection over ALL timesteps (bias folded once).
        xp = jnp.dot(inp, wih, preferred_element_type=jnp.float32) + bias   # (T*B, 128)
        h = jnp.zeros((B, H), jnp.float32)
        c = jnp.zeros((B, H), jnp.float32)
        # Fully unrolled time recurrence; one fused (B,32)@(32,128) MXU op per step.
        for t in range(T):
            r = t * B
            pre = xp[r:r + B] + jnp.dot(h, whh, preferred_element_type=jnp.float32)
            act = jnp.where(sig_mask, jax.nn.sigmoid(pre), jnp.tanh(pre))
            i_g = act[:, 0:H]
            f_g = act[:, H:2 * H]
            o_g = act[:, 2 * H:3 * H]
            g_g = act[:, 3 * H:]
            c = f_g * c + i_g * g_g
            h = o_g * jnp.tanh(c)
            out_scratch[r:r + B, :] = h          # vst slot, off the serial chain
        return h, c

    # ---- layer 0 -------------------------------------------------------------
    h0, c0 = lstm_layer(
        f,
        w_ref[_L0_WIH:_L0_WIH + FEAT, :],
        w_ref[_L0_WHH:_L0_WHH + HIDDEN, :],
        w_ref[_L0_B:_L0_B + 1, :],
        seq0)

    # ---- layer 1 -------------------------------------------------------------
    h1, c1 = lstm_layer(
        seq0[...],
        w_ref[_L1_WIH:_L1_WIH + HIDDEN, :],
        w_ref[_L1_WHH:_L1_WHH + HIDDEN, :],
        w_ref[_L1_B:_L1_B + 1, :],
        seq1)

    # ---- fc head (zero-padded to 128 lanes) + single-shot output write ------
    wfc = w_ref[_FC_W:_FC_W + HIDDEN, :]
    bfc = w_ref[_FC_B:_FC_B + 1, :]
    y = jnp.dot(seq1[...], wfc, preferred_element_type=jnp.float32) + bfc   # (T*B, 128)
    out_ref[0:TB, :] = y.astype(out_ref.dtype)
    state = jnp.concatenate([h0, h1, c0, c1], axis=0)                       # (2*L*B, H)
    out_ref[TB:TB + 2 * N_LAYERS * B, 0:H] = state.astype(out_ref.dtype)


# ---------------- wrapper -----------------------------------------------------

_VMEM = pl.BlockSpec(memory_space=pltpu.MemorySpace.VMEM)


@jax.jit
def forward(x, mlp_slab, w_slab):
    # x: (T, B, OBS). lstm_states default None -> zero initial state.
    # TODO(synk): optional `lstm_states` initial-state input not plumbed; default-None path only.
    T, B, D = x.shape
    TB = T * B
    LB = N_LAYERS * B

    out = pl.pallas_call(
        functools.partial(_fused_forward_kernel, batch=B),
        out_shape=jax.ShapeDtypeStruct((TB + 2 * LB, G4), DTYPE),
        in_specs=[_VMEM, _VMEM, _VMEM],
        out_specs=_VMEM,
        scratch_shapes=[pltpu.VMEM((TB, HIDDEN), jnp.float32),
                        pltpu.VMEM((TB, HIDDEN), jnp.float32)],
    )(x.reshape(TB, D), mlp_slab, w_slab)

    y = out[0:TB, 0:OUT].reshape(T, B, OUT)
    h_n = out[TB:TB + LB, 0:HIDDEN].reshape(N_LAYERS, B, HIDDEN)
    c_n = out[TB + LB:TB + 2 * LB, 0:HIDDEN].reshape(N_LAYERS, B, HIDDEN)
    return y, (h_n, c_n)


# ---------------- one-time weight packing (outside forward) ------------------

def pack_params(params):
    H = HIDDEN

    def reorder(w):  # gate order [i, f, g, o] -> [i, f, o, g] along last axis
        return jnp.concatenate(
            [w[..., 0:H], w[..., H:2 * H], w[..., 3 * H:4 * H], w[..., 2 * H:3 * H]],
            axis=-1)

    def pad_rows(a, rows):
        return jnp.pad(a, ((0, rows - a.shape[0]), (0, 0)))

    # MLP slab (96, 64): [W1 | B1(pad8) | W2 | B2(pad8)]
    mlp = jnp.concatenate([
        params["w1"],
        pad_rows(params["b1"], 8),
        params["w2"],
        pad_rows(params["b2"], 8),
    ], axis=0).astype(DTYPE)
    assert mlp.shape == (_MLP_ROWS, FEAT)

    # LSTM + FC slab (216, 128)
    wih0, whh0, b0 = params["lstm"][0]
    wih1, whh1, b1 = params["lstm"][1]
    wfc_pad = jnp.pad(params["wfc"], ((0, 0), (0, G4 - OUT)))          # (32, 128)
    bfc_pad = jnp.pad(params["bfc"], ((0, 7), (0, G4 - OUT)))          # (8, 128)
    w = jnp.concatenate([
        reorder(wih0),                 # (64, 128)
        reorder(whh0),                 # (32, 128)
        pad_rows(reorder(b0), 8),      # (8, 128)
        reorder(wih1),                 # (32, 128)
        reorder(whh1),                 # (32, 128)
        pad_rows(reorder(b1), 8),      # (8, 128)
        wfc_pad,                       # (32, 128)
        bfc_pad,                       # (8, 128)
    ], axis=0).astype(DTYPE)
    assert w.shape == (_W_ROWS, G4)

    return jax.device_put(mlp), jax.device_put(w)


# ---------------- parameter init (deterministic, PyTorch-like uniform) ------

def init_params(key):
    p = {}
    ks = list(jax.random.split(key, 16))

    def uni(k, shape, bound):
        return jax.random.uniform(k, shape, DTYPE, -bound, bound)

    # feature MLP (weights stored already transposed: (in, out))
    p["w1"] = uni(ks[0], (OBS, FEAT), 1.0 / jnp.sqrt(OBS))
    p["b1"] = uni(ks[1], (1, FEAT), 1.0 / jnp.sqrt(OBS))
    p["w2"] = uni(ks[2], (FEAT, FEAT), 1.0 / jnp.sqrt(FEAT))
    p["b2"] = uni(ks[3], (1, FEAT), 1.0 / jnp.sqrt(FEAT))

    # LSTM layers: wih (in,4H), whh (H,4H), b (1,4H) = b_ih + b_hh; gate order [i,f,g,o]
    p["lstm"] = []
    kb = 1.0 / jnp.sqrt(HIDDEN)
    for l in range(N_LAYERS):
        in_dim = FEAT if l == 0 else HIDDEN
        kk = jax.random.split(ks[4 + l], 4)
        wih = uni(kk[0], (in_dim, 4 * HIDDEN), kb)
        whh = uni(kk[1], (HIDDEN, 4 * HIDDEN), kb)
        b = uni(kk[2], (1, 4 * HIDDEN), kb) + uni(kk[3], (1, 4 * HIDDEN), kb)
        p["lstm"].append((wih, whh, b))

    # fc head
    p["wfc"] = uni(ks[10], (HIDDEN, OUT), 1.0 / jnp.sqrt(HIDDEN))
    p["bfc"] = uni(ks[11], (1, OUT), 1.0 / jnp.sqrt(HIDDEN))
    return p


# ---------------- pure-JAX reference for validation --------------------------

def ref_forward(x, params):
    T, B, D = x.shape
    f = x.reshape(T * B, D)
    f = _mish(f @ params["w1"] + params["b1"])
    f = _mish(f @ params["w2"] + params["b2"])
    f = f.reshape(T, B, FEAT)
    inp = f
    hs, cs = [], []
    H = HIDDEN
    for l in range(N_LAYERS):
        wih, whh, b = params["lstm"][l]
        h = jnp.zeros((B, H), DTYPE)
        c = jnp.zeros((B, H), DTYPE)
        outs = []
        for t in range(T):
            g = inp[t] @ wih + h @ whh + b
            i_g = jax.nn.sigmoid(g[:, :H])
            f_g = jax.nn.sigmoid(g[:, H:2 * H])
            g_g = jnp.tanh(g[:, 2 * H:3 * H])
            o_g = jax.nn.sigmoid(g[:, 3 * H:])
            c = f_g * c + i_g * g_g
            h = o_g * jnp.tanh(c)
            outs.append(h)
        inp = jnp.stack(outs, axis=0)
        hs.append(h)
        cs.append(c)
    y = inp.reshape(T * B, H) @ params["wfc"] + params["bfc"]
    return y.reshape(T, B, OUT), (jnp.stack(hs), jnp.stack(cs))


if __name__ == "__main__":
    key = jax.random.PRNGKey(0)
    k_x, k_p = jax.random.split(key)
    x = jax.random.normal(k_x, (SEQ, BATCH, OBS), DTYPE)
    params = init_params(k_p)
    mlp_slab, w_slab = pack_params(params)   # one-time weight packing

    y, (h_n, c_n) = jax.block_until_ready(forward(x, mlp_slab, w_slab))

    y_ref, (h_ref, c_ref) = ref_forward(x, params)
    assert jnp.allclose(y, y_ref, atol=1e-4, rtol=1e-4)
    assert jnp.allclose(h_n, h_ref, atol=1e-4, rtol=1e-4)
    assert jnp.allclose(c_n, c_ref, atol=1e-4, rtol=1e-4)

    print("KERNEL_OK")
</pallas_src>

<mosaic_0001>
module attributes {stable_mosaic.version = 11 : i64} {
  func.func @_fused_forward_kernel(%arg0: memref<16x16xf32, #tpu.memory_space<vmem>>, %arg1: memref<96x64xf32, #tpu.memory_space<vmem>>, %arg2: memref<216x128xf32, #tpu.memory_space<vmem>>, %arg3: memref<24x128xf32, #tpu.memory_space<vmem>>, %arg4: memref<16x32xf32, #tpu.memory_space<vmem>>, %arg5: memref<16x32xf32, #tpu.memory_space<vmem>>) attributes {dimension_semantics = [], scalar_prefetch = 0 : i64, scratch_operands = 2 : i64, tpu.core_type = #tpu.core_type<tc>} {
    %c0 = arith.constant 0 : index
    %c0_0 = arith.constant 0 : index
    %0 = vector.load %arg1[%c0, %c0_0] : memref<96x64xf32, #tpu.memory_space<vmem>>, vector<16x64xf32>
    %c16 = arith.constant 16 : index
    %c0_1 = arith.constant 0 : index
    %1 = vector.load %arg1[%c16, %c0_1] : memref<96x64xf32, #tpu.memory_space<vmem>>, vector<1x64xf32>
    %c24 = arith.constant 24 : index
    %c0_2 = arith.constant 0 : index
    %2 = vector.load %arg1[%c24, %c0_2] : memref<96x64xf32, #tpu.memory_space<vmem>>, vector<64x64xf32>
    %c88 = arith.constant 88 : index
    %c0_3 = arith.constant 0 : index
    %3 = vector.load %arg1[%c88, %c0_3] : memref<96x64xf32, #tpu.memory_space<vmem>>, vector<1x64xf32>
    %c0_4 = arith.constant 0 : index
    %c0_5 = arith.constant 0 : index
    %4 = vector.load %arg0[%c0_4, %c0_5] : memref<16x16xf32, #tpu.memory_space<vmem>>, vector<16x16xf32>
    %cst = arith.constant dense<0.000000e+00> : vector<16x64xf32>
    %5 = tpu.matmul %4, %0, %cst {dimension_numbers = #tpu.dot_dimension_numbers<[1], [0], [0], [1], [0, 0, 1, 1], [], []>} : vector<16x16xf32>, vector<16x64xf32>, vector<16x64xf32> -> vector<16x64xf32>
    %6 = vector.broadcast %1 : vector<1x64xf32> to vector<16x64xf32>
    %7 = arith.addf %5, %6 : vector<16x64xf32>
    %cst_6 = arith.constant 2.000000e+01 : f32
    %8 = vector.broadcast %cst_6 : f32 to vector<16x64xf32>
    %9 = arith.cmpf ogt, %7, %8 : vector<16x64xf32>
    %cst_7 = arith.constant 2.000000e+01 : f32
    %10 = vector.broadcast %cst_7 : f32 to vector<16x64xf32>
    %11 = arith.minimumf %7, %10 : vector<16x64xf32>
    %12 = math.exp %11 : vector<16x64xf32>
    %13 = math.log1p %12 : vector<16x64xf32>
    %14 = arith.select %9, %7, %13 : vector<16x64xi1>, vector<16x64xf32>
    %15 = math.tanh %14 : vector<16x64xf32>
    %16 = arith.mulf %7, %15 : vector<16x64xf32>
    %cst_8 = arith.constant dense<0.000000e+00> : vector<16x64xf32>
    %17 = tpu.matmul %16, %2, %cst_8 {dimension_numbers = #tpu.dot_dimension_numbers<[1], [0], [0], [1], [0, 0, 1, 1], [], []>} : vector<16x64xf32>, vector<64x64xf32>, vector<16x64xf32> -> vector<16x64xf32>
    %18 = vector.broadcast %3 : vector<1x64xf32> to vector<16x64xf32>
    %19 = arith.addf %17, %18 : vector<16x64xf32>
    %cst_9 = arith.constant 2.000000e+01 : f32
    %20 = vector.broadcast %cst_9 : f32 to vector<16x64xf32>
    %21 = arith.cmpf ogt, %19, %20 : vector<16x64xf32>
    %cst_10 = arith.constant 2.000000e+01 : f32
    %22 = vector.broadcast %cst_10 : f32 to vector<16x64xf32>
    %23 = arith.minimumf %19, %22 : vector<16x64xf32>
    %24 = math.exp %23 : vector<16x64xf32>
    %25 = math.log1p %24 : vector<16x64xf32>
    %26 = arith.select %21, %19, %25 : vector<16x64xi1>, vector<16x64xf32>
    %27 = math.tanh %26 : vector<16x64xf32>
    %28 = arith.mulf %19, %27 : vector<16x64xf32>
    %29 = tpu.iota {dimensions = array<i32: 1>} : vector<2x128xi32>
    %c96_i32 = arith.constant 96 : i32
    %30 = vector.broadcast %c96_i32 : i32 to vector<2x128xi32>
    %31 = arith.cmpi slt, %29, %30 : vector<2x128xi32>
    %c0_11 = arith.constant 0 : index
    %c0_12 = arith.constant 0 : index
    %32 = vector.load %arg2[%c0_11, %c0_12] : memref<216x128xf32, #tpu.memory_space<vmem>>, vector<64x128xf32>
    %c64 = arith.constant 64 : index
    %c0_13 = arith.constant 0 : index
    %33 = vector.load %arg2[%c64, %c0_13] : memref<216x128xf32, #tpu.memory_space<vmem>>, vector<32x128xf32>
    %c96 = arith.constant 96 : index
    %c0_14 = arith.constant 0 : index
    %34 = vector.load %arg2[%c96, %c0_14] : memref<216x128xf32, #tpu.memory_space<vmem>>, vector<1x128xf32>
    %cst_15 = arith.constant dense<0.000000e+00> : vector<16x128xf32>
    %35 = tpu.matmul %28, %32, %cst_15 {dimension_numbers = #tpu.dot_dimension_numbers<[1], [0], [0], [1], [0, 0, 1, 1], [], []>} : vector<16x64xf32>, vector<64x128xf32>, vector<16x128xf32> -> vector<16x128xf32>
    %36 = vector.broadcast %34 : vector<1x128xf32> to vector<16x128xf32>
    %37 = arith.addf %35, %36 : vector<16x128xf32>
    %cst_16 = arith.constant 0.000000e+00 : f32
    %38 = vector.broadcast %cst_16 : f32 to vector<2x32xf32>
    %cst_17 = arith.constant 0.000000e+00 : f32
    %39 = vector.broadcast %cst_17 : f32 to vector<2x32xf32>
    %40 = vector.extract_strided_slice %37 {offsets = [0, 0], sizes = [2, 128], strides = [1, 1]} : vector<16x128xf32> to vector<2x128xf32>
    %cst_18 = arith.constant dense<0.000000e+00> : vector<2x128xf32>
    %41 = tpu.matmul %38, %33, %cst_18 {dimension_numbers = #tpu.dot_dimension_numbers<[1], [0], [0], [1], [0, 0, 1, 1], [], []>} : vector<2x32xf32>, vector<32x128xf32>, vector<2x128xf32> -> vector<2x128xf32>
    %42 = arith.addf %40, %41 : vector<2x128xf32>
    %43 = arith.negf %42 : vector<2x128xf32>
    %44 = math.exp %43 : vector<2x128xf32>
    %cst_19 = arith.constant 1.000000e+00 : f32
    %45 = vector.broadcast %cst_19 : f32 to vector<2x128xf32>
    %46 = arith.addf %45, %44 : vector<2x128xf32>
    %47 = arith.divf %45, %46 : vector<2x128xf32>
    %48 = math.tanh %42 : vector<2x128xf32>
    %49 = arith.select %31, %47, %48 : vector<2x128xi1>, vector<2x128xf32>
    %50 = vector.extract_strided_slice %49 {offsets = [0, 0], sizes = [2, 32], strides = [1, 1]} : vector<2x128xf32> to vector<2x32xf32>
    %51 = vector.extract_strided_slice %49 {offsets = [0, 32], sizes = [2, 32], strides = [1, 1]} : vector<2x128xf32> to vector<2x32xf32>
    %52 = vector.extract_strided_slice %49 {offsets = [0, 64], sizes = [2, 32], strides = [1, 1]} : vector<2x128xf32> to vector<2x32xf32>
    %53 = vector.extract_strided_slice %49 {offsets = [0, 96], sizes = [2, 32], strides = [1, 1]} : vector<2x128xf32> to vector<2x32xf32>
    %54 = arith.mulf %51, %39 : vector<2x32xf32>
    %55 = arith.mulf %50, %53 : vector<2x32xf32>
    %56 = arith.addf %54, %55 : vector<2x32xf32>
    %57 = math.tanh %56 : vector<2x32xf32>
    %58 = arith.mulf %52, %57 : vector<2x32xf32>
    %c0_20 = arith.constant 0 : index
    %c0_21 = arith.constant 0 : index
    %59 = vector.load %arg4[%c0_20, %c0_21] : memref<16x32xf32, #tpu.memory_space<vmem>>, vector<2x32xf32>
    tpu.vector_store %arg4[%c0_20, %c0_21], %58 {strides = array<i32>} : memref<16x32xf32, #tpu.memory_space<vmem>>, vector<2x32xf32>,
    %60 = vector.extract_strided_slice %37 {offsets = [2, 0], sizes = [2, 128], strides = [1, 1]} : vector<16x128xf32> to vector<2x128xf32>
    %cst_22 = arith.constant dense<0.000000e+00> : vector<2x128xf32>
    %61 = tpu.matmul %58, %33, %cst_22 {dimension_numbers = #tpu.dot_dimension_numbers<[1], [0], [0], [1], [0, 0, 1, 1], [], []>} : vector<2x32xf32>, vector<32x128xf32>, vector<2x128xf32> -> vector<2x128xf32>
    %62 = arith.addf %60, %61 : vector<2x128xf32>
    %63 = arith.negf %62 : vector<2x128xf32>
    %64 = math.exp %63 : vector<2x128xf32>
    %cst_23 = arith.constant 1.000000e+00 : f32
    %65 = vector.broadcast %cst_23 : f32 to vector<2x128xf32>
    %66 = arith.addf %65, %64 : vector<2x128xf32>
    %67 = arith.divf %65, %66 : vector<2x128xf32>
    %68 = math.tanh %62 : vector<2x128xf32>
    %69 = arith.select %31, %67, %68 : vector<2x128xi1>, vector<2x128xf32>
    %70 = vector.extract_strided_slice %69 {offsets = [0, 0], sizes = [2, 32], strides = [1, 1]} : vector<2x128xf32> to vector<2x32xf32>
    %71 = vector.extract_strided_slice %69 {offsets = [0, 32], sizes = [2, 32], strides = [1, 1]} : vector<2x128xf32> to vector<2x32xf32>
    %72 = vector.extract_strided_slice %69 {offsets = [0, 64], sizes = [2, 32], strides = [1, 1]} : vector<2x128xf32> to vector<2x32xf32>
    %73 = vector.extract_strided_slice %69 {offsets = [0, 96], sizes = [2, 32], strides = [1, 1]} : vector<2x128xf32> to vector<2x32xf32>
    %74 = arith.mulf %71, %56 : vector<2x32xf32>
    %75 = arith.mulf %70, %73 : vector<2x32xf32>
    %76 = arith.addf %74, %75 : vector<2x32xf32>
    %77 = math.tanh %76 : vector<2x32xf32>
    %78 = arith.mulf %72, %77 : vector<2x32xf32>
    %c2 = arith.constant 2 : index
    %c0_24 = arith.constant 0 : index
    %79 = vector.load %arg4[%c2, %c0_24] : memref<16x32xf32, #tpu.memory_space<vmem>>, vector<2x32xf32>
    tpu.vector_store %arg4[%c2, %c0_24], %78 {strides = array<i32>} : memref<16x32xf32, #tpu.memory_space<vmem>>, vector<2x32xf32>,
    %80 = vector.extract_strided_slice %37 {offsets = [4, 0], sizes = [2, 128], strides = [1, 1]} : vector<16x128xf32> to vector<2x128xf32>
    %cst_25 = arith.constant dense<0.000000e+00> : vector<2x128xf32>
    %81 = tpu.matmul %78, %33, %cst_25 {dimension_numbers = #tpu.dot_dimension_numbers<[1], [0], [0], [1], [0, 0, 1, 1], [], []>} : vector<2x32xf32>, vector<32x128xf32>, vector<2x128xf32> -> vector<2x128xf32>
    %82 = arith.addf %80, %81 : vector<2x128xf32>
    %83 = arith.negf %82 : vector<2x128xf32>
    %84 = math.exp %83 : vector<2x128xf32>
    %cst_26 = arith.constant 1.000000e+00 : f32
    %85 = vector.broadcast %cst_26 : f32 to vector<2x128xf32>
    %86 = arith.addf %85, %84 : vector<2x128xf32>
    %87 = arith.divf %85, %86 : vector<2x128xf32>
    %88 = math.tanh %82 : vector<2x128xf32>
    %89 = arith.select %31, %87, %88 : vector<2x128xi1>, vector<2x128xf32>
    %90 = vector.extract_strided_slice %89 {offsets = [0, 0], sizes = [2, 32], strides = [1, 1]} : vector<2x128xf32> to vector<2x32xf32>
    %91 = vector.extract_strided_slice %89 {offsets = [0, 32], sizes = [2, 32], strides = [1, 1]} : vector<2x128xf32> to vector<2x32xf32>
    %92 = vector.extract_strided_slice %89 {offsets = [0, 64], sizes = [2, 32], strides = [1, 1]} : vector<2x128xf32> to vector<2x32xf32>
    %93 = vector.extract_strided_slice %89 {offsets = [0, 96], sizes = [2, 32], strides = [1, 1]} : vector<2x128xf32> to vector<2x32xf32>
    %94 = arith.mulf %91, %76 : vector<2x32xf32>
    %95 = arith.mulf %90, %93 : vector<2x32xf32>
    %96 = arith.addf %94, %95 : vector<2x32xf32>
    %97 = math.tanh %96 : vector<2x32xf32>
    %98 = arith.mulf %92, %97 : vector<2x32xf32>
    %c4 = arith.constant 4 : index
    %c0_27 = arith.constant 0 : index
    %99 = vector.load %arg4[%c4, %c0_27] : memref<16x32xf32, #tpu.memory_space<vmem>>, vector<2x32xf32>
    tpu.vector_store %arg4[%c4, %c0_27], %98 {strides = array<i32>} : memref<16x32xf32, #tpu.memory_space<vmem>>, vector<2x32xf32>,
    %100 = vector.extract_strided_slice %37 {offsets = [6, 0], sizes = [2, 128], strides = [1, 1]} : vector<16x128xf32> to vector<2x128xf32>
    %cst_28 = arith.constant dense<0.000000e+00> : vector<2x128xf32>
    %101 = tpu.matmul %98, %33, %cst_28 {dimension_numbers = #tpu.dot_dimension_numbers<[1], [0], [0], [1], [0, 0, 1, 1], [], []>} : vector<2x32xf32>, vector<32x128xf32>, vector<2x128xf32> -> vector<2x128xf32>
    %102 = arith.addf %100, %101 : vector<2x128xf32>
    %103 = arith.negf %102 : vector<2x128xf32>
    %104 = math.exp %103 : vector<2x128xf32>
    %cst_29 = arith.constant 1.000000e+00 : f32
    %105 = vector.broadcast %cst_29 : f32 to vector<2x128xf32>
    %106 = arith.addf %105, %104 : vector<2x128xf32>
    %107 = arith.divf %105, %106 : vector<2x128xf32>
    %108 = math.tanh %102 : vector<2x128xf32>
    %109 = arith.select %31, %107, %108 : vector<2x128xi1>, vector<2x128xf32>
    %110 = vector.extract_strided_slice %109 {offsets = [0, 0], sizes = [2, 32], strides = [1, 1]} : vector<2x128xf32> to vector<2x32xf32>
    %111 = vector.extract_strided_slice %109 {offsets = [0, 32], sizes = [2, 32], strides = [1, 1]} : vector<2x128xf32> to vector<2x32xf32>
    %112 = vector.extract_strided_slice %109 {offsets = [0, 64], sizes = [2, 32], strides = [1, 1]} : vector<2x128xf32> to vector<2x32xf32>
    %113 = vector.extract_strided_slice %109 {offsets = [0, 96], sizes = [2, 32], strides = [1, 1]} : vector<2x128xf32> to vector<2x32xf32>
    %114 = arith.mulf %111, %96 : vector<2x32xf32>
    %115 = arith.mulf %110, %113 : vector<2x32xf32>
    %116 = arith.addf %114, %115 : vector<2x32xf32>
    %117 = math.tanh %116 : vector<2x32xf32>
    %118 = arith.mulf %112, %117 : vector<2x32xf32>
    %c6 = arith.constant 6 : index
    %c0_30 = arith.constant 0 : index
    %119 = vector.load %arg4[%c6, %c0_30] : memref<16x32xf32, #tpu.memory_space<vmem>>, vector<2x32xf32>
    tpu.vector_store %arg4[%c6, %c0_30], %118 {strides = array<i32>} : memref<16x32xf32, #tpu.memory_space<vmem>>, vector<2x32xf32>,
    %120 = vector.extract_strided_slice %37 {offsets = [8, 0], sizes = [2, 128], strides = [1, 1]} : vector<16x128xf32> to vector<2x128xf32>
    %cst_31 = arith.constant dense<0.000000e+00> : vector<2x128xf32>
    %121 = tpu.matmul %118, %33, %cst_31 {dimension_numbers = #tpu.dot_dimension_numbers<[1], [0], [0], [1], [0, 0, 1, 1], [], []>} : vector<2x32xf32>, vector<32x128xf32>, vector<2x128xf32> -> vector<2x128xf32>
    %122 = arith.addf %120, %121 : vector<2x128xf32>
    %123 = arith.negf %122 : vector<2x128xf32>
    %124 = math.exp %123 : vector<2x128xf32>
    %cst_32 = arith.constant 1.000000e+00 : f32
    %125 = vector.broadcast %cst_32 : f32 to vector<2x128xf32>
    %126 = arith.addf %125, %124 : vector<2x128xf32>
    %127 = arith.divf %125, %126 : vector<2x128xf32>
    %128 = math.tanh %122 : vector<2x128xf32>
    %129 = arith.select %31, %127, %128 : vector<2x128xi1>, vector<2x128xf32>
    %130 = vector.extract_strided_slice %129 {offsets = [0, 0], sizes = [2, 32], strides = [1, 1]} : vector<2x128xf32> to vector<2x32xf32>
    %131 = vector.extract_strided_slice %129 {offsets = [0, 32], sizes = [2, 32], strides = [1, 1]} : vector<2x128xf32> to vector<2x32xf32>
    %132 = vector.extract_strided_slice %129 {offsets = [0, 64], sizes = [2, 32], strides = [1, 1]} : vector<2x128xf32> to vector<2x32xf32>
    %133 = vector.extract_strided_slice %129 {offsets = [0, 96], sizes = [2, 32], strides = [1, 1]} : vector<2x128xf32> to vector<2x32xf32>
    %134 = arith.mulf %131, %116 : vector<2x32xf32>
    %135 = arith.mulf %130, %133 : vector<2x32xf32>
    %136 = arith.addf %134, %135 : vector<2x32xf32>
    %137 = math.tanh %136 : vector<2x32xf32>
    %138 = arith.mulf %132, %137 : vector<2x32xf32>
    %c8 = arith.constant 8 : index
    %c0_33 = arith.constant 0 : index
    %139 = vector.load %arg4[%c8, %c0_33] : memref<16x32xf32, #tpu.memory_space<vmem>>, vector<2x32xf32>
    tpu.vector_store %arg4[%c8, %c0_33], %138 {strides = array<i32>} : memref<16x32xf32, #tpu.memory_space<vmem>>, vector<2x32xf32>,
    %140 = vector.extract_strided_slice %37 {offsets = [10, 0], sizes = [2, 128], strides = [1, 1]} : vector<16x128xf32> to vector<2x128xf32>
    %cst_34 = arith.constant dense<0.000000e+00> : vector<2x128xf32>
    %141 = tpu.matmul %138, %33, %cst_34 {dimension_numbers = #tpu.dot_dimension_numbers<[1], [0], [0], [1], [0, 0, 1, 1], [], []>} : vector<2x32xf32>, vector<32x128xf32>, vector<2x128xf32> -> vector<2x128xf32>
    %142 = arith.addf %140, %141 : vector<2x128xf32>
    %143 = arith.negf %142 : vector<2x128xf32>
    %144 = math.exp %143 : vector<2x128xf32>
    %cst_35 = arith.constant 1.000000e+00 : f32
    %145 = vector.broadcast %cst_35 : f32 to vector<2x128xf32>
    %146 = arith.addf %145, %144 : vector<2x128xf32>
    %147 = arith.divf %145, %146 : vector<2x128xf32>
    %148 = math.tanh %142 : vector<2x128xf32>
    %149 = arith.select %31, %147, %148 : vector<2x128xi1>, vector<2x128xf32>
    %150 = vector.extract_strided_slice %149 {offsets = [0, 0], sizes = [2, 32], strides = [1, 1]} : vector<2x128xf32> to vector<2x32xf32>
    %151 = vector.extract_strided_slice %149 {offsets = [0, 32], sizes = [2, 32], strides = [1, 1]} : vector<2x128xf32> to vector<2x32xf32>
    %152 = vector.extract_strided_slice %149 {offsets = [0, 64], sizes = [2, 32], strides = [1, 1]} : vector<2x128xf32> to vector<2x32xf32>
    %153 = vector.extract_strided_slice %149 {offsets = [0, 96], sizes = [2, 32], strides = [1, 1]} : vector<2x128xf32> to vector<2x32xf32>
    %154 = arith.mulf %151, %136 : vector<2x32xf32>
    %155 = arith.mulf %150, %153 : vector<2x32xf32>
    %156 = arith.addf %154, %155 : vector<2x32xf32>
    %157 = math.tanh %156 : vector<2x32xf32>
    %158 = arith.mulf %152, %157 : vector<2x32xf32>
    %c10 = arith.constant 10 : index
    %c0_36 = arith.constant 0 : index
    %159 = vector.load %arg4[%c10, %c0_36] : memref<16x32xf32, #tpu.memory_space<vmem>>, vector<2x32xf32>
    tpu.vector_store %arg4[%c10, %c0_36], %158 {strides = array<i32>} : memref<16x32xf32, #tpu.memory_space<vmem>>, vector<2x32xf32>,
    %160 = vector.extract_strided_slice %37 {offsets = [12, 0], sizes = [2, 128], strides = [1, 1]} : vector<16x128xf32> to vector<2x128xf32>
    %cst_37 = arith.constant dense<0.000000e+00> : vector<2x128xf32>
    %161 = tpu.matmul %158, %33, %cst_37 {dimension_numbers = #tpu.dot_dimension_numbers<[1], [0], [0], [1], [0, 0, 1, 1], [], []>} : vector<2x32xf32>, vector<32x128xf32>, vector<2x128xf32> -> vector<2x128xf32>
    %162 = arith.addf %160, %161 : vector<2x128xf32>
    %163 = arith.negf %162 : vector<2x128xf32>
    %164 = math.exp %163 : vector<2x128xf32>
    %cst_38 = arith.constant 1.000000e+00 : f32
    %165 = vector.broadcast %cst_38 : f32 to vector<2x128xf32>
    %166 = arith.addf %165, %164 : vector<2x128xf32>
    %167 = arith.divf %165, %166 : vector<2x128xf32>
    %168 = math.tanh %162 : vector<2x128xf32>
    %169 = arith.select %31, %167, %168 : vector<2x128xi1>, vector<2x128xf32>
    %170 = vector.extract_strided_slice %169 {offsets = [0, 0], sizes = [2, 32], strides = [1, 1]} : vector<2x128xf32> to vector<2x32xf32>
    %171 = vector.extract_strided_slice %169 {offsets = [0, 32], sizes = [2, 32], strides = [1, 1]} : vector<2x128xf32> to vector<2x32xf32>
    %172 = vector.extract_strided_slice %169 {offsets = [0, 64], sizes = [2, 32], strides = [1, 1]} : vector<2x128xf32> to vector<2x32xf32>
    %173 = vector.extract_strided_slice %169 {offsets = [0, 96], sizes = [2, 32], strides = [1, 1]} : vector<2x128xf32> to vector<2x32xf32>
    %174 = arith.mulf %171, %156 : vector<2x32xf32>
    %175 = arith.mulf %170, %173 : vector<2x32xf32>
    %176 = arith.addf %174, %175 : vector<2x32xf32>
    %177 = math.tanh %176 : vector<2x32xf32>
    %178 = arith.mulf %172, %177 : vector<2x32xf32>
    %c12 = arith.constant 12 : index
    %c0_39 = arith.constant 0 : index
    %179 = vector.load %arg4[%c12, %c0_39] : memref<16x32xf32, #tpu.memory_space<vmem>>, vector<2x32xf32>
    tpu.vector_store %arg4[%c12, %c0_39], %178 {strides = array<i32>} : memref<16x32xf32, #tpu.memory_space<vmem>>, vector<2x32xf32>,
    %180 = vector.extract_strided_slice %37 {offsets = [14, 0], sizes = [2, 128], strides = [1, 1]} : vector<16x128xf32> to vector<2x128xf32>
    %cst_40 = arith.constant dense<0.000000e+00> : vector<2x128xf32>
    %181 = tpu.matmul %178, %33, %cst_40 {dimension_numbers = #tpu.dot_dimension_numbers<[1], [0], [0], [1], [0, 0, 1, 1], [], []>} : vector<2x32xf32>, vector<32x128xf32>, vector<2x128xf32> -> vector<2x128xf32>
    %182 = arith.addf %180, %181 : vector<2x128xf32>
    %183 = arith.negf %182 : vector<2x128xf32>
    %184 = math.exp %183 : vector<2x128xf32>
    %cst_41 = arith.constant 1.000000e+00 : f32
    %185 = vector.broadcast %cst_41 : f32 to vector<2x128xf32>
    %186 = arith.addf %185, %184 : vector<2x128xf32>
    %187 = arith.divf %185, %186 : vector<2x128xf32>
    %188 = math.tanh %182 : vector<2x128xf32>
    %189 = arith.select %31, %187, %188 : vector<2x128xi1>, vector<2x128xf32>
    %190 = vector.extract_strided_slice %189 {offsets = [0, 0], sizes = [2, 32], strides = [1, 1]} : vector<2x128xf32> to vector<2x32xf32>
    %191 = vector.extract_strided_slice %189 {offsets = [0, 32], sizes = [2, 32], strides = [1, 1]} : vector<2x128xf32> to vector<2x32xf32>
    %192 = vector.extract_strided_slice %189 {offsets = [0, 64], sizes = [2, 32], strides = [1, 1]} : vector<2x128xf32> to vector<2x32xf32>
    %193 = vector.extract_strided_slice %189 {offsets = [0, 96], sizes = [2, 32], strides = [1, 1]} : vector<2x128xf32> to vector<2x32xf32>
    %194 = arith.mulf %191, %176 : vector<2x32xf32>
    %195 = arith.mulf %190, %193 : vector<2x32xf32>
    %196 = arith.addf %194, %195 : vector<2x32xf32>
    %197 = math.tanh %196 : vector<2x32xf32>
    %198 = arith.mulf %192, %197 : vector<2x32xf32>
    %c14 = arith.constant 14 : index
    %c0_42 = arith.constant 0 : index
    %199 = vector.load %arg4[%c14, %c0_42] : memref<16x32xf32, #tpu.memory_space<vmem>>, vector<2x32xf32>
    tpu.vector_store %arg4[%c14, %c0_42], %198 {strides = array<i32>} : memref<16x32xf32, #tpu.memory_space<vmem>>, vector<2x32xf32>,
    %c0_43 = arith.constant 0 : index
    %c0_44 = arith.constant 0 : index
    %200 = vector.load %arg4[%c0_43, %c0_44] : memref<16x32xf32, #tpu.memory_space<vmem>>, vector<16x32xf32>
    %c104 = arith.constant 104 : index
    %c0_45 = arith.constant 0 : index
    %201 = vector.load %arg2[%c104, %c0_45] : memref<216x128xf32, #tpu.memory_space<vmem>>, vector<32x128xf32>
    %c136 = arith.constant 136 : index
    %c0_46 = arith.constant 0 : index
    %202 = vector.load %arg2[%c136, %c0_46] : memref<216x128xf32, #tpu.memory_space<vmem>>, vector<32x128xf32>
    %c168 = arith.constant 168 : index
    %c0_47 = arith.constant 0 : index
    %203 = vector.load %arg2[%c168, %c0_47] : memref<216x128xf32, #tpu.memory_space<vmem>>, vector<1x128xf32>
    %cst_48 = arith.constant dense<0.000000e+00> : vector<16x128xf32>
    %204 = tpu.matmul %200, %201, %cst_48 {dimension_numbers = #tpu.dot_dimension_numbers<[1], [0], [0], [1], [0, 0, 1, 1], [], []>} : vector<16x32xf32>, vector<32x128xf32>, vector<16x128xf32> -> vector<16x128xf32>
    %205 = vector.broadcast %203 : vector<1x128xf32> to vector<16x128xf32>
    %206 = arith.addf %204, %205 : vector<16x128xf32>
    %cst_49 = arith.constant 0.000000e+00 : f32
    %207 = vector.broadcast %cst_49 : f32 to vector<2x32xf32>
    %cst_50 = arith.constant 0.000000e+00 : f32
    %208 = vector.broadcast %cst_50 : f32 to vector<2x32xf32>
    %209 = vector.extract_strided_slice %206 {offsets = [0, 0], sizes = [2, 128], strides = [1, 1]} : vector<16x128xf32> to vector<2x128xf32>
    %cst_51 = arith.constant dense<0.000000e+00> : vector<2x128xf32>
    %210 = tpu.matmul %207, %202, %cst_51 {dimension_numbers = #tpu.dot_dimension_numbers<[1], [0], [0], [1], [0, 0, 1, 1], [], []>} : vector<2x32xf32>, vector<32x128xf32>, vector<2x128xf32> -> vector<2x128xf32>
    %211 = arith.addf %209, %210 : vector<2x128xf32>
    %212 = arith.negf %211 : vector<2x128xf32>
    %213 = math.exp %212 : vector<2x128xf32>
    %cst_52 = arith.constant 1.000000e+00 : f32
    %214 = vector.broadcast %cst_52 : f32 to vector<2x128xf32>
    %215 = arith.addf %214, %213 : vector<2x128xf32>
    %216 = arith.divf %214, %215 : vector<2x128xf32>
    %217 = math.tanh %211 : vector<2x128xf32>
    %218 = arith.select %31, %216, %217 : vector<2x128xi1>, vector<2x128xf32>
    %219 = vector.extract_strided_slice %218 {offsets = [0, 0], sizes = [2, 32], strides = [1, 1]} : vector<2x128xf32> to vector<2x32xf32>
    %220 = vector.extract_strided_slice %218 {offsets = [0, 32], sizes = [2, 32], strides = [1, 1]} : vector<2x128xf32> to vector<2x32xf32>
    %221 = vector.extract_strided_slice %218 {offsets = [0, 64], sizes = [2, 32], strides = [1, 1]} : vector<2x128xf32> to vector<2x32xf32>
    %222 = vector.extract_strided_slice %218 {offsets = [0, 96], sizes = [2, 32], strides = [1, 1]} : vector<2x128xf32> to vector<2x32xf32>
    %223 = arith.mulf %220, %208 : vector<2x32xf32>
    %224 = arith.mulf %219, %222 : vector<2x32xf32>
    %225 = arith.addf %223, %224 : vector<2x32xf32>
    %226 = math.tanh %225 : vector<2x32xf32>
    %227 = arith.mulf %221, %226 : vector<2x32xf32>
    %c0_53 = arith.constant 0 : index
    %c0_54 = arith.constant 0 : index
    %228 = vector.load %arg5[%c0_53, %c0_54] : memref<16x32xf32, #tpu.memory_space<vmem>>, vector<2x32xf32>
    tpu.vector_store %arg5[%c0_53, %c0_54], %227 {strides = array<i32>} : memref<16x32xf32, #tpu.memory_space<vmem>>, vector<2x32xf32>,
    %229 = vector.extract_strided_slice %206 {offsets = [2, 0], sizes = [2, 128], strides = [1, 1]} : vector<16x128xf32> to vector<2x128xf32>
    %cst_55 = arith.constant dense<0.000000e+00> : vector<2x128xf32>
    %230 = tpu.matmul %227, %202, %cst_55 {dimension_numbers = #tpu.dot_dimension_numbers<[1], [0], [0], [1], [0, 0, 1, 1], [], []>} : vector<2x32xf32>, vector<32x128xf32>, vector<2x128xf32> -> vector<2x128xf32>
    %231 = arith.addf %229, %230 : vector<2x128xf32>
    %232 = arith.negf %231 : vector<2x128xf32>
    %233 = math.exp %232 : vector<2x128xf32>
    %cst_56 = arith.constant 1.000000e+00 : f32
    %234 = vector.broadcast %cst_56 : f32 to vector<2x128xf32>
    %235 = arith.addf %234, %233 : vector<2x128xf32>
    %236 = arith.divf %234, %235 : vector<2x128xf32>
    %237 = math.tanh %231 : vector<2x128xf32>
    %238 = arith.select %31, %236, %237 : vector<2x128xi1>, vector<2x128xf32>
    %239 = vector.extract_strided_slice %238 {offsets = [0, 0], sizes = [2, 32], strides = [1, 1]} : vector<2x128xf32> to vector<2x32xf32>
    %240 = vector.extract_strided_slice %238 {offsets = [0, 32], sizes = [2, 32], strides = [1, 1]} : vector<2x128xf32> to vector<2x32xf32>
    %241 = vector.extract_strided_slice %238 {offsets = [0, 64], sizes = [2, 32], strides = [1, 1]} : vector<2x128xf32> to vector<2x32xf32>
    %242 = vector.extract_strided_slice %238 {offsets = [0, 96], sizes = [2, 32], strides = [1, 1]} : vector<2x128xf32> to vector<2x32xf32>
    %243 = arith.mulf %240, %225 : vector<2x32xf32>
    %244 = arith.mulf %239, %242 : vector<2x32xf32>
    %245 = arith.addf %243, %244 : vector<2x32xf32>
    %246 = math.tanh %245 : vector<2x32xf32>
    %247 = arith.mulf %241, %246 : vector<2x32xf32>
    %c2_57 = arith.constant 2 : index
    %c0_58 = arith.constant 0 : index
    %248 = vector.load %arg5[%c2_57, %c0_58] : memref<16x32xf32, #tpu.memory_space<vmem>>, vector<2x32xf32>
    tpu.vector_store %arg5[%c2_57, %c0_58], %247 {strides = array<i32>} : memref<16x32xf32, #tpu.memory_space<vmem>>, vector<2x32xf32>,
    %249 = vector.extract_strided_slice %206 {offsets = [4, 0], sizes = [2, 128], strides = [1, 1]} : vector<16x128xf32> to vector<2x128xf32>
    %cst_59 = arith.constant dense<0.000000e+00> : vector<2x128xf32>
    %250 = tpu.matmul %247, %202, %cst_59 {dimension_numbers = #tpu.dot_dimension_numbers<[1], [0], [0], [1], [0, 0, 1, 1], [], []>} : vector<2x32xf32>, vector<32x128xf32>, vector<2x128xf32> -> vector<2x128xf32>
    %251 = arith.addf %249, %250 : vector<2x128xf32>
    %252 = arith.negf %251 : vector<2x128xf32>
    %253 = math.exp %252 : vector<2x128xf32>
    %cst_60 = arith.constant 1.000000e+00 : f32
    %254 = vector.broadcast %cst_60 : f32 to vector<2x128xf32>
    %255 = arith.addf %254, %253 : vector<2x128xf32>
    %256 = arith.divf %254, %255 : vector<2x128xf32>
    %257 = math.tanh %251 : vector<2x128xf32>
    %258 = arith.select %31, %256, %257 : vector<2x128xi1>, vector<2x128xf32>
    %259 = vector.extract_strided_slice %258 {offsets = [0, 0], sizes = [2, 32], strides = [1, 1]} : vector<2x128xf32> to vector<2x32xf32>
    %260 = vector.extract_strided_slice %258 {offsets = [0, 32], sizes = [2, 32], strides = [1, 1]} : vector<2x128xf32> to vector<2x32xf32>
    %261 = vector.extract_strided_slice %258 {offsets = [0, 64], sizes = [2, 32], strides = [1, 1]} : vector<2x128xf32> to vector<2x32xf32>
    %262 = vector.extract_strided_slice %258 {offsets = [0, 96], sizes = [2, 32], strides = [1, 1]} : vector<2x128xf32> to vector<2x32xf32>
    %263 = arith.mulf %260, %245 : vector<2x32xf32>
    %264 = arith.mulf %259, %262 : vector<2x32xf32>
    %265 = arith.addf %263, %264 : vector<2x32xf32>
    %266 = math.tanh %265 : vector<2x32xf32>
    %267 = arith.mulf %261, %266 : vector<2x32xf32>
    %c4_61 = arith.constant 4 : index
    %c0_62 = arith.constant 0 : index
    %268 = vector.load %arg5[%c4_61, %c0_62] : memref<16x32xf32, #tpu.memory_space<vmem>>, vector<2x32xf32>
    tpu.vector_store %arg5[%c4_61, %c0_62], %267 {strides = array<i32>} : memref<16x32xf32, #tpu.memory_space<vmem>>, vector<2x32xf32>,
    %269 = vector.extract_strided_slice %206 {offsets = [6, 0], sizes = [2, 128], strides = [1, 1]} : vector<16x128xf32> to vector<2x128xf32>
    %cst_63 = arith.constant dense<0.000000e+00> : vector<2x128xf32>
    %270 = tpu.matmul %267, %202, %cst_63 {dimension_numbers = #tpu.dot_dimension_numbers<[1], [0], [0], [1], [0, 0, 1, 1], [], []>} : vector<2x32xf32>, vector<32x128xf32>, vector<2x128xf32> -> vector<2x128xf32>
    %271 = arith.addf %269, %270 : vector<2x128xf32>
    %272 = arith.negf %271 : vector<2x128xf32>
    %273 = math.exp %272 : vector<2x128xf32>
    %cst_64 = arith.constant 1.000000e+00 : f32
    %274 = vector.broadcast %cst_64 : f32 to vector<2x128xf32>
    %275 = arith.addf %274, %273 : vector<2x128xf32>
    %276 = arith.divf %274, %275 : vector<2x128xf32>
    %277 = math.tanh %271 : vector<2x128xf32>
    %278 = arith.select %31, %276, %277 : vector<2x128xi1>, vector<2x128xf32>
    %279 = vector.extract_strided_slice %278 {offsets = [0, 0], sizes = [2, 32], strides = [1, 1]} : vector<2x128xf32> to vector<2x32xf32>
    %280 = vector.extract_strided_slice %278 {offsets = [0, 32], sizes = [2, 32], strides = [1, 1]} : vector<2x128xf32> to vector<2x32xf32>
    %281 = vector.extract_strided_slice %278 {offsets = [0, 64], sizes = [2, 32], strides = [1, 1]} : vector<2x128xf32> to vector<2x32xf32>
    %282 = vector.extract_strided_slice %278 {offsets = [0, 96], sizes = [2, 32], strides = [1, 1]} : vector<2x128xf32> to vector<2x32xf32>
    %283 = arith.mulf %280, %265 : vector<2x32xf32>
    %284 = arith.mulf %279, %282 : vector<2x32xf32>
    %285 = arith.addf %283, %284 : vector<2x32xf32>
    %286 = math.tanh %285 : vector<2x32xf32>
    %287 = arith.mulf %281, %286 : vector<2x32xf32>
    %c6_65 = arith.constant 6 : index
    %c0_66 = arith.constant 0 : index
    %288 = vector.load %arg5[%c6_65, %c0_66] : memref<16x32xf32, #tpu.memory_space<vmem>>, vector<2x32xf32>
    tpu.vector_store %arg5[%c6_65, %c0_66], %287 {strides = array<i32>} : memref<16x32xf32, #tpu.memory_space<vmem>>, vector<2x32xf32>,
    %289 = vector.extract_strided_slice %206 {offsets = [8, 0], sizes = [2, 128], strides = [1, 1]} : vector<16x128xf32> to vector<2x128xf32>
    %cst_67 = arith.constant dense<0.000000e+00> : vector<2x128xf32>
    %290 = tpu.matmul %287, %202, %cst_67 {dimension_numbers = #tpu.dot_dimension_numbers<[1], [0], [0], [1], [0, 0, 1, 1], [], []>} : vector<2x32xf32>, vector<32x128xf32>, vector<2x128xf32> -> vector<2x128xf32>
    %291 = arith.addf %289, %290 : vector<2x128xf32>
    %292 = arith.negf %291 : vector<2x128xf32>
    %293 = math.exp %292 : vector<2x128xf32>
    %cst_68 = arith.constant 1.000000e+00 : f32
    %294 = vector.broadcast %cst_68 : f32 to vector<2x128xf32>
    %295 = arith.addf %294, %293 : vector<2x128xf32>
    %296 = arith.divf %294, %295 : vector<2x128xf32>
    %297 = math.tanh %291 : vector<2x128xf32>
    %298 = arith.select %31, %296, %297 : vector<2x128xi1>, vector<2x128xf32>
    %299 = vector.extract_strided_slice %298 {offsets = [0, 0], sizes = [2, 32], strides = [1, 1]} : vector<2x128xf32> to vector<2x32xf32>
    %300 = vector.extract_strided_slice %298 {offsets = [0, 32], sizes = [2, 32], strides = [1, 1]} : vector<2x128xf32> to vector<2x32xf32>
    %301 = vector.extract_strided_slice %298 {offsets = [0, 64], sizes = [2, 32], strides = [1, 1]} : vector<2x128xf32> to vector<2x32xf32>
    %302 = vector.extract_strided_slice %298 {offsets = [0, 96], sizes = [2, 32], strides = [1, 1]} : vector<2x128xf32> to vector<2x32xf32>
    %303 = arith.mulf %300, %285 : vector<2x32xf32>
    %304 = arith.mulf %299, %302 : vector<2x32xf32>
    %305 = arith.addf %303, %304 : vector<2x32xf32>
    %306 = math.tanh %305 : vector<2x32xf32>
    %307 = arith.mulf %301, %306 : vector<2x32xf32>
    %c8_69 = arith.constant 8 : index
    %c0_70 = arith.constant 0 : index
    %308 = vector.load %arg5[%c8_69, %c0_70] : memref<16x32xf32, #tpu.memory_space<vmem>>, vector<2x32xf32>
    tpu.vector_store %arg5[%c8_69, %c0_70], %307 {strides = array<i32>} : memref<16x32xf32, #tpu.memory_space<vmem>>, vector<2x32xf32>,
    %309 = vector.extract_strided_slice %206 {offsets = [10, 0], sizes = [2, 128], strides = [1, 1]} : vector<16x128xf32> to vector<2x128xf32>
    %cst_71 = arith.constant dense<0.000000e+00> : vector<2x128xf32>
    %310 = tpu.matmul %307, %202, %cst_71 {dimension_numbers = #tpu.dot_dimension_numbers<[1], [0], [0], [1], [0, 0, 1, 1], [], []>} : vector<2x32xf32>, vector<32x128xf32>, vector<2x128xf32> -> vector<2x128xf32>
    %311 = arith.addf %309, %310 : vector<2x128xf32>
    %312 = arith.negf %311 : vector<2x128xf32>
    %313 = math.exp %312 : vector<2x128xf32>
    %cst_72 = arith.constant 1.000000e+00 : f32
    %314 = vector.broadcast %cst_72 : f32 to vector<2x128xf32>
    %315 = arith.addf %314, %313 : vector<2x128xf32>
    %316 = arith.divf %314, %315 : vector<2x128xf32>
    %317 = math.tanh %311 : vector<2x128xf32>
    %318 = arith.select %31, %316, %317 : vector<2x128xi1>, vector<2x128xf32>
    %319 = vector.extract_strided_slice %318 {offsets = [0, 0], sizes = [2, 32], strides = [1, 1]} : vector<2x128xf32> to vector<2x32xf32>
    %320 = vector.extract_strided_slice %318 {offsets = [0, 32], sizes = [2, 32], strides = [1, 1]} : vector<2x128xf32> to vector<2x32xf32>
    %321 = vector.extract_strided_slice %318 {offsets = [0, 64], sizes = [2, 32], strides = [1, 1]} : vector<2x128xf32> to vector<2x32xf32>
    %322 = vector.extract_strided_slice %318 {offsets = [0, 96], sizes = [2, 32], strides = [1, 1]} : vector<2x128xf32> to vector<2x32xf32>
    %323 = arith.mulf %320, %305 : vector<2x32xf32>
    %324 = arith.mulf %319, %322 : vector<2x32xf32>
    %325 = arith.addf %323, %324 : vector<2x32xf32>
    %326 = math.tanh %325 : vector<2x32xf32>
    %327 = arith.mulf %321, %326 : vector<2x32xf32>
    %c10_73 = arith.constant 10 : index
    %c0_74 = arith.constant 0 : index
    %328 = vector.load %arg5[%c10_73, %c0_74] : memref<16x32xf32, #tpu.memory_space<vmem>>, vector<2x32xf32>
    tpu.vector_store %arg5[%c10_73, %c0_74], %327 {strides = array<i32>} : memref<16x32xf32, #tpu.memory_space<vmem>>, vector<2x32xf32>,
    %329 = vector.extract_strided_slice %206 {offsets = [12, 0], sizes = [2, 128], strides = [1, 1]} : vector<16x128xf32> to vector<2x128xf32>
    %cst_75 = arith.constant dense<0.000000e+00> : vector<2x128xf32>
    %330 = tpu.matmul %327, %202, %cst_75 {dimension_numbers = #tpu.dot_dimension_numbers<[1], [0], [0], [1], [0, 0, 1, 1], [], []>} : vector<2x32xf32>, vector<32x128xf32>, vector<2x128xf32> -> vector<2x128xf32>
    %331 = arith.addf %329, %330 : vector<2x128xf32>
    %332 = arith.negf %331 : vector<2x128xf32>
    %333 = math.exp %332 : vector<2x128xf32>
    %cst_76 = arith.constant 1.000000e+00 : f32
    %334 = vector.broadcast %cst_76 : f32 to vector<2x128xf32>
    %335 = arith.addf %334, %333 : vector<2x128xf32>
    %336 = arith.divf %334, %335 : vector<2x128xf32>
    %337 = math.tanh %331 : vector<2x128xf32>
    %338 = arith.select %31, %336, %337 : vector<2x128xi1>, vector<2x128xf32>
    %339 = vector.extract_strided_slice %338 {offsets = [0, 0], sizes = [2, 32], strides = [1, 1]} : vector<2x128xf32> to vector<2x32xf32>
    %340 = vector.extract_strided_slice %338 {offsets = [0, 32], sizes = [2, 32], strides = [1, 1]} : vector<2x128xf32> to vector<2x32xf32>
    %341 = vector.extract_strided_slice %338 {offsets = [0, 64], sizes = [2, 32], strides = [1, 1]} : vector<2x128xf32> to vector<2x32xf32>
    %342 = vector.extract_strided_slice %338 {offsets = [0, 96], sizes = [2, 32], strides = [1, 1]} : vector<2x128xf32> to vector<2x32xf32>
    %343 = arith.mulf %340, %325 : vector<2x32xf32>
    %344 = arith.mulf %339, %342 : vector<2x32xf32>
    %345 = arith.addf %343, %344 : vector<2x32xf32>
    %346 = math.tanh %345 : vector<2x32xf32>
    %347 = arith.mulf %341, %346 : vector<2x32xf32>
    %c12_77 = arith.constant 12 : index
    %c0_78 = arith.constant 0 : index
    %348 = vector.load %arg5[%c12_77, %c0_78] : memref<16x32xf32, #tpu.memory_space<vmem>>, vector<2x32xf32>
    tpu.vector_store %arg5[%c12_77, %c0_78], %347 {strides = array<i32>} : memref<16x32xf32, #tpu.memory_space<vmem>>, vector<2x32xf32>,
    %349 = vector.extract_strided_slice %206 {offsets = [14, 0], sizes = [2, 128], strides = [1, 1]} : vector<16x128xf32> to vector<2x128xf32>
    %cst_79 = arith.constant dense<0.000000e+00> : vector<2x128xf32>
    %350 = tpu.matmul %347, %202, %cst_79 {dimension_numbers = #tpu.dot_dimension_numbers<[1], [0], [0], [1], [0, 0, 1, 1], [], []>} : vector<2x32xf32>, vector<32x128xf32>, vector<2x128xf32> -> vector<2x128xf32>
    %351 = arith.addf %349, %350 : vector<2x128xf32>
    %352 = arith.negf %351 : vector<2x128xf32>
    %353 = math.exp %352 : vector<2x128xf32>
    %cst_80 = arith.constant 1.000000e+00 : f32
    %354 = vector.broadcast %cst_80 : f32 to vector<2x128xf32>
    %355 = arith.addf %354, %353 : vector<2x128xf32>
    %356 = arith.divf %354, %355 : vector<2x128xf32>
    %357 = math.tanh %351 : vector<2x128xf32>
    %358 = arith.select %31, %356, %357 : vector<2x128xi1>, vector<2x128xf32>
    %359 = vector.extract_strided_slice %358 {offsets = [0, 0], sizes = [2, 32], strides = [1, 1]} : vector<2x128xf32> to vector<2x32xf32>
    %360 = vector.extract_strided_slice %358 {offsets = [0, 32], sizes = [2, 32], strides = [1, 1]} : vector<2x128xf32> to vector<2x32xf32>
    %361 = vector.extract_strided_slice %358 {offsets = [0, 64], sizes = [2, 32], strides = [1, 1]} : vector<2x128xf32> to vector<2x32xf32>
    %362 = vector.extract_strided_slice %358 {offsets = [0, 96], sizes = [2, 32], strides = [1, 1]} : vector<2x128xf32> to vector<2x32xf32>
    %363 = arith.mulf %360, %345 : vector<2x32xf32>
    %364 = arith.mulf %359, %362 : vector<2x32xf32>
    %365 = arith.addf %363, %364 : vector<2x32xf32>
    %366 = math.tanh %365 : vector<2x32xf32>
    %367 = arith.mulf %361, %366 : vector<2x32xf32>
    %c14_81 = arith.constant 14 : index
    %c0_82 = arith.constant 0 : index
    %368 = vector.load %arg5[%c14_81, %c0_82] : memref<16x32xf32, #tpu.memory_space<vmem>>, vector<2x32xf32>
    tpu.vector_store %arg5[%c14_81, %c0_82], %367 {strides = array<i32>} : memref<16x32xf32, #tpu.memory_space<vmem>>, vector<2x32xf32>,
    %c176 = arith.constant 176 : index
    %c0_83 = arith.constant 0 : index
    %369 = vector.load %arg2[%c176, %c0_83] : memref<216x128xf32, #tpu.memory_space<vmem>>, vector<32x128xf32>
    %c208 = arith.constant 208 : index
    %c0_84 = arith.constant 0 : index
    %370 = vector.load %arg2[%c208, %c0_84] : memref<216x128xf32, #tpu.memory_space<vmem>>, vector<1x128xf32>
    %c0_85 = arith.constant 0 : index
    %c0_86 = arith.constant 0 : index
    %371 = vector.load %arg5[%c0_85, %c0_86] : memref<16x32xf32, #tpu.memory_space<vmem>>, vector<16x32xf32>
    %cst_87 = arith.constant dense<0.000000e+00> : vector<16x128xf32>
    %372 = tpu.matmul %371, %369, %cst_87 {dimension_numbers = #tpu.dot_dimension_numbers<[1], [0], [0], [1], [0, 0, 1, 1], [], []>} : vector<16x32xf32>, vector<32x128xf32>, vector<16x128xf32> -> vector<16x128xf32>
    %373 = vector.broadcast %370 : vector<1x128xf32> to vector<16x128xf32>
    %374 = arith.addf %372, %373 : vector<16x128xf32>
    %c0_88 = arith.constant 0 : index
    %c0_89 = arith.constant 0 : index
    %375 = vector.load %arg3[%c0_88, %c0_89] : memref<24x128xf32, #tpu.memory_space<vmem>>, vector<16x128xf32>
    tpu.vector_store %arg3[%c0_88, %c0_89], %374 {strides = array<i32>} : memref<24x128xf32, #tpu.memory_space<vmem>>, vector<16x128xf32>,
    %376 = tpu.concatenate %198, %367, %196, %365 in 0 : vector<2x32xf32>, vector<2x32xf32>, vector<2x32xf32>, vector<2x32xf32> -> vector<8x32xf32>
    %c16_90 = arith.constant 16 : index
    %c0_91 = arith.constant 0 : index
    %377 = vector.load %arg3[%c16_90, %c0_91] : memref<24x128xf32, #tpu.memory_space<vmem>>, vector<8x32xf32>
    tpu.vector_store %arg3[%c16_90, %c0_91], %376 {strides = array<i32>} : memref<24x128xf32, #tpu.memory_space<vmem>>, vector<8x32xf32>,
    return
  }
}

</mosaic_0001>

<llo_original>
// kernel: forward.1
$region0: #{forward.1}
  #allocation0 [shape = 'u32[]', space=smem, size = 0x4, offset = 0x4, fixed_abs, tag = 'smem constant byte address 0x4 - core index']
  #allocation1 [shape = 'u32[144,128]{1,0:T(1,128)}', space=vmem, size = 0x12000, scoped, tag = 'internal scratch']
  #allocation2 [shape = 'f32[16,32]{1,0:T(8,128)}', space=vmem, size = 0x2000, scoped, tag = 'scratch operand']
  #allocation3 [shape = 'f32[16,32]{1,0:T(8,128)}', space=vmem, size = 0x2000, scoped, tag = 'scratch operand']
  %s0 = inlined_call_operand.vmem [shape: f32[16,16], index: 0, kind: input, shape index: {}]
  %s1 = inlined_call_operand.vmem [shape: f32[96,64], index: 1, kind: input, shape index: {}]
  %s2 = inlined_call_operand.hbm [shape: f32[216,128], index: 2, kind: input, shape index: {}]
  %s3 = inlined_call_operand.vmem [shape: f32[24,128], index: 3, kind: output, shape index: {}]
  %s4 = sld [smem:[#allocation0]]
  $region26: #{forward.1} parent=0
    _
  %s6 = ssub.s32 1, %s4
  %s7 = scalar_select 0, %s6, %s4
  $region1: #{forward.1} parent=0
    #allocation4 [shape = 'u8[110592]{0}', space=vmem, size = 0x1b000, scoped, tag = 'input window, operand 2, single buffered']
    #allocation5 [shape = 's32[1]{0}', space=sflag, size = 0x4, scoped, tag = 'scoped memory for forward.1']
    %8 = vsyncpa [#allocation5], 0
    // Predicated region
    $region2: #{forward.1} parent=1 // pred_check
      _
    $region3: #{forward.1} parent=1 // pred_check_branch
      %10 = sbr.rel (0) target = $region5
    $region4: #{forward.1} parent=1 // pred_region
      _
    $region5: #{forward.1} parent=1 // pred_fallthru
      _
    // Predicated region
    $region6: #{forward.1} parent=1 // pred_check
      _
    $region7: #{forward.1} parent=1 // pred_check_branch
      %12 = sbr.rel (0) target = $region9
    $region8: #{forward.1} parent=1 // pred_region
      _
    $region9: #{forward.1} parent=1 // pred_fallthru
      _
    // Predicated region
    $region10: #{forward.1} parent=1 // pred_check
      _
    $region11: #{forward.1} parent=1 // pred_check_branch
      %14 = sbr.rel (0) target = $region13
    $region12: #{forward.1} parent=1 // pred_region
      %s16 = ssub.s32 3456, 3456
      %17 = vsyncadd [#allocation5], %s16
      %s18 = sshll.u32 [#allocation4], 4
      %s19 = int_to_ptr.vmem [resolvable:$true] %s18
      %24 = dma.hbm_to_vmem [thread:$0]  %s2, 3456, %s19, [#allocation5], 128, 128, 8
    $region13: #{forward.1} parent=1 // pred_fallthru
      _
    // Predicated region
    $region14: #{forward.1} parent=1 // pred_check
      _
    $region15: #{forward.1} parent=1 // pred_check_branch
      %26 = sbr.rel (0) target = $region17
    $region16: #{forward.1} parent=1 // pred_region
      %27 = dma.done [#allocation5], 3456
    $region17: #{forward.1} parent=1 // pred_fallthru
      _
    %v28 = vld [vmem:[%s1] sm:$0xff]
    %v29 = vld [vmem:[%s1 + $0x8] sm:$0xff]
    %v30 = vld [vmem:[%s1 + $0x10] sm:$0x1]
    %v31 = vld [vmem:[%s1 + $0x18] sm:$0xff]
    %v32 = vld [vmem:[%s1 + $0x20] sm:$0xff]
    %v33 = vld [vmem:[%s1 + $0x28] sm:$0xff]
    %v34 = vld [vmem:[%s1 + $0x30] sm:$0xff]
    %v35 = vld [vmem:[%s1 + $0x38] sm:$0xff]
    %v36 = vld [vmem:[%s1 + $0x40] sm:$0xff]
    %v37 = vld [vmem:[%s1 + $0x48] sm:$0xff]
    %v38 = vld [vmem:[%s1 + $0x50] sm:$0xff]
    %v39 = vld [vmem:[%s1 + $0x58] sm:$0x1]
    %v40 = vld [vmem:[%s0] sm:$0xff]
    %v41 = vld [vmem:[%s0 + $0x8] sm:$0xff]
    %v42 = vlaneseq
    %v43 = vshrl.u32 %v42, 7
    %v44 = vsub.s32 0, %v43
    %v45 = vrot.slane %v30, %v44
    %vm46 = vcmask 130048
    %v48 = vsel %vm46, %v40, 0
    %v51 = vsel %vm46, %v41, 0
    %53 = vmatprep.subr.mxu0 0.0
    %54 = vmatpush1.msra.mxu0 %v28
    %55 = vmatprep.subr.mxu0 0.0
    %56 = vmatpush1.msra.mxu0 %v29
    %57 = vmatprep.subr.mxu0 0.0
    %58 = vmatpush1.msra.mxu0 0.0
    %59 = vmatprep.subr.mxu0 0.0
    %60 = vmatpush1.msra.mxu0 0.0
    %61 = vmatprep.subr.mxu0 0.0
    %62 = vmatpush1.msra.mxu0 0.0
    %63 = vmatprep.subr.mxu0 0.0
    %64 = vmatpush1.msra.mxu0 0.0
    %65 = vmatprep.subr.mxu0 0.0
    %66 = vmatpush1.msra.mxu0 0.0
    %67 = vmatprep.subr.mxu0 0.0
    %68 = vmatpush1.msra.mxu0 0.0
    %69 = vmatprep.subr.mxu0 0.0
    %70 = vmatpush1.msra.mxu0 0.0
    %71 = vmatprep.subr.mxu0 0.0
    %72 = vmatpush1.msra.mxu0 0.0
    %73 = vmatprep.subr.mxu0 0.0
    %74 = vmatpush1.msra.mxu0 0.0
    %75 = vmatprep.subr.mxu0 0.0
    %76 = vmatpush1.msra.mxu0 0.0
    %77 = vmatprep.subr.mxu0 0.0
    %78 = vmatpush1.msra.mxu0 0.0
    %79 = vmatprep.subr.mxu0 0.0
    %80 = vmatpush1.msra.mxu0 0.0
    %81 = vmatprep.subr.mxu0 0.0
    %82 = vmatpush1.msra.mxu0 0.0
    %83 = vmatprep.subr.mxu0 0.0
    %84 = vmatpush1.msra.mxu0 0.0
    %85 = vmatprep.subr.mxu0 0.0
    %86 = vmatpush1.msra.mxu0 0.0
    %87 = vmatprep.subr.mxu0 0.0
    %88 = vmatpush1.msra.mxu0 0.0
    %89 = vmatprep.subr.mxu0 0.0
    %90 = vmatpush1.msra.mxu0 0.0
    %91 = vmatprep.subr.mxu0 0.0
    %92 = vmatpush1.msra.mxu0 0.0
    %93 = vmatprep.subr.mxu0 0.0
    %94 = vmatpush1.msra.mxu0 0.0
    %95 = vmatprep.subr.mxu0 0.0
    %96 = vmatpush1.msra.mxu0 0.0
    %97 = vmatprep.subr.mxu0 0.0
    %98 = vmatpush1.msra.mxu0 0.0
    %99 = vmatprep.subr.mxu0 0.0
    %100 = vmatpush1.msra.mxu0 0.0
    %101 = vmatprep.subr.mxu0 0.0
    %102 = vmatpush1.msra.mxu0 0.0
    %103 = vmatprep.subr.mxu0 0.0
    %104 = vmatpush1.msra.mxu0 0.0
    %105 = vmatprep.subr.mxu0 0.0
    %106 = vmatpush1.msra.mxu0 0.0
    %107 = vmatprep.subr.mxu0 0.0
    %108 = vmatpush1.msra.mxu0 0.0
    %109 = vmatprep.subr.mxu0 0.0
    %110 = vmatpush1.msra.mxu0 0.0
    %111 = vmatprep.subr.mxu0 0.0
    %112 = vmatpush1.msra.mxu0 0.0
    %113 = vmatprep.subr.mxu0 0.0
    %114 = vmatpush1.msra.mxu0 0.0
    %115 = vmatprep.subr.mxu0 0.0
    %116 = vmatpush1.msra.mxu0 0.0
    %117 = vmatprep.mubr.f32.mxu0 0.0
    %118 = vmatmul.mubr.f32.gmra.mrb[0].mxu0 %v48
    %v119 = vpop.f32.mrb[0].mxu0
    %v120 = vadd.f32 %v45, %v119
    %v121 = vpop.f32.mrb[0].mxu0
    %122 = vmatprep.mubr.f32.mxu0 0.0
    %123 = vmatmul.mubr.f32.gmra.mrb[0].mxu0 %v51
    %v124 = vpop.f32.mrb[0].mxu0
    %v125 = vadd.f32 %v45, %v124
    %v126 = vpop.f32.mrb[0].mxu0
    %127 = vdwg.mxu0
    %vm128 = vcmp.gt.f32.partialorder %v120, 20.0
    %vm129 = vcmp.gt.f32.partialorder %v125, 20.0
    %v130 = vmin.f32 %v120, 20.0
    %v131 = vmin.f32 %v125, 20.0
    %v132 = vmul.f32 %v130, 1.442695
    %v133 = vpow.pop %v132
    %v134 = vmul.f32 %v131, 1.442695
    %v135 = vpow.pop %v134
    %v136 = vadd.f32 %v133, 1.0
    %v137 = vlog2.pop %v136
    %v138 = vmul.f32 %v137, 0.6931472
    %v139 = vmul.f32 -0.5, %v133
    %v140 = vadd.f32 %v139, 1.0
    %v141 = vmul.f32 %v140, %v133
    %v142 = vand.u32 2147483647, %v133
    %vm143 = vcmp.lt.f32.partialorder %v142, 0.0004427343
    %v144 = vsel %vm143, %v141, %v138
    %v145 = vadd.f32 %v135, 1.0
    %v146 = vlog2.pop %v145
    %v147 = vmul.f32 %v146, 0.6931472
    %v148 = vmul.f32 -0.5, %v135
    %v149 = vadd.f32 %v148, 1.0
    %v150 = vmul.f32 %v149, %v135
    %v151 = vand.u32 2147483647, %v135
    %vm152 = vcmp.lt.f32.partialorder %v151, 0.0004427343
    %v153 = vsel %vm152, %v150, %v147
    %v154 = vsel %vm128, %v120, %v144
    %v155 = vsel %vm129, %v125, %v153
    %v156 = vtanh.pop %v154
    %v157 = vtanh.pop %v155
    %v158 = vmul.f32 %v120, %v156
    %v159 = vmul.f32 %v125, %v157
    %v160 = vlaneseq
    %v161 = vshrl.u32 %v160, 7
    %v162 = vsub.s32 0, %v161
    %v163 = vrot.slane %v39, %v162
    %vm164 = vcmask 523264
    %v166 = vsel %vm164, %v158, 0
    %v169 = vsel %vm164, %v159, 0
    %171 = vmatprep.subr.mxu0 0.0
    %172 = vmatpush1.msra.mxu0 %v31
    %173 = vmatprep.subr.mxu0 0.0
    %174 = vmatpush1.msra.mxu0 %v32
    %175 = vmatprep.subr.mxu0 0.0
    %176 = vmatpush1.msra.mxu0 %v33
    %177 = vmatprep.subr.mxu0 0.0
    %178 = vmatpush1.msra.mxu0 %v34
    %179 = vmatprep.subr.mxu0 0.0
    %180 = vmatpush1.msra.mxu0 %v35
    %181 = vmatprep.subr.mxu0 0.0
    %182 = vmatpush1.msra.mxu0 %v36
    %183 = vmatprep.subr.mxu0 0.0
    %184 = vmatpush1.msra.mxu0 %v37
    %185 = vmatprep.subr.mxu0 0.0
    %186 = vmatpush1.msra.mxu0 %v38
    %187 = vmatprep.subr.mxu0 0.0
    %188 = vmatpush1.msra.mxu0 0.0
    %189 = vmatprep.subr.mxu0 0.0
    %190 = vmatpush1.msra.mxu0 0.0
    %191 = vmatprep.subr.mxu0 0.0
    %192 = vmatpush1.msra.mxu0 0.0
    %193 = vmatprep.subr.mxu0 0.0
    %194 = vmatpush1.msra.mxu0 0.0
    %195 = vmatprep.subr.mxu0 0.0
    %196 = vmatpush1.msra.mxu0 0.0
    %197 = vmatprep.subr.mxu0 0.0
    %198 = vmatpush1.msra.mxu0 0.0
    %199 = vmatprep.subr.mxu0 0.0
    %200 = vmatpush1.msra.mxu0 0.0
    %201 = vmatprep.subr.mxu0 0.0
    %202 = vmatpush1.msra.mxu0 0.0
    %203 = vmatprep.subr.mxu0 0.0
    %204 = vmatpush1.msra.mxu0 0.0
    %205 = vmatprep.subr.mxu0 0.0
    %206 = vmatpush1.msra.mxu0 0.0
    %207 = vmatprep.subr.mxu0 0.0
    %208 = vmatpush1.msra.mxu0 0.0
    %209 = vmatprep.subr.mxu0 0.0
    %210 = vmatpush1.msra.mxu0 0.0
    %211 = vmatprep.subr.mxu0 0.0
    %212 = vmatpush1.msra.mxu0 0.0
    %213 = vmatprep.subr.mxu0 0.0
    %214 = vmatpush1.msra.mxu0 0.0
    %215 = vmatprep.subr.mxu0 0.0
    %216 = vmatpush1.msra.mxu0 0.0
    %217 = vmatprep.subr.mxu0 0.0
    %218 = vmatpush1.msra.mxu0 0.0
    %219 = vmatprep.subr.mxu0 0.0
    %220 = vmatpush1.msra.mxu0 0.0
    %221 = vmatprep.subr.mxu0 0.0
    %222 = vmatpush1.msra.mxu0 0.0
    %223 = vmatprep.subr.mxu0 0.0
    %224 = vmatpush1.msra.mxu0 0.0
    %225 = vmatprep.subr.mxu0 0.0
    %226 = vmatpush1.msra.mxu0 0.0
    %227 = vmatprep.subr.mxu0 0.0
    %228 = vmatpush1.msra.mxu0 0.0
    %229 = vmatprep.subr.mxu0 0.0
    %230 = vmatpush1.msra.mxu0 0.0
    %231 = vmatprep.subr.mxu0 0.0
    %232 = vmatpush1.msra.mxu0 0.0
    %233 = vmatprep.subr.mxu0 0.0
    %234 = vmatpush1.msra.mxu0 0.0
    %235 = vmatprep.mubr.f32.mxu0 0.0
    %236 = vmatmul.mubr.f32.gmra.mrb[0].mxu0 %v166
    %v237 = vpop.f32.mrb[0].mxu0
    %v238 = vadd.f32 %v163, %v237
    %v239 = vpop.f32.mrb[0].mxu0
    %240 = vmatprep.mubr.f32.mxu0 0.0
    %241 = vmatmul.mubr.f32.gmra.mrb[0].mxu0 %v169
    %v242 = vpop.f32.mrb[0].mxu0
    %v243 = vadd.f32 %v163, %v242
    %v244 = vpop.f32.mrb[0].mxu0
    %245 = vdwg.mxu0
    %vm246 = vcmp.gt.f32.partialorder %v238, 20.0
    %vm247 = vcmp.gt.f32.partialorder %v243, 20.0
    %v248 = vmin.f32 %v238, 20.0
    %v249 = vmin.f32 %v243, 20.0
    %v250 = vmul.f32 %v248, 1.442695
    %v251 = vpow.pop %v250
    %v252 = vmul.f32 %v249, 1.442695
    %v253 = vpow.pop %v252
    %v254 = vadd.f32 %v251, 1.0
    %v255 = vlog2.pop %v254
    %v256 = vmul.f32 %v255, 0.6931472
    %v257 = vmul.f32 -0.5, %v251
    %v258 = vadd.f32 %v257, 1.0
    %v259 = vmul.f32 %v258, %v251
    %v260 = vand.u32 2147483647, %v251
    %vm261 = vcmp.lt.f32.partialorder %v260, 0.0004427343
    %v262 = vsel %vm261, %v259, %v256
    %v263 = vadd.f32 %v253, 1.0
    %v264 = vlog2.pop %v263
    %v265 = vmul.f32 %v264, 0.6931472
    %v266 = vmul.f32 -0.5, %v253
    %v267 = vadd.f32 %v266, 1.0
    %v268 = vmul.f32 %v267, %v253
    %v269 = vand.u32 2147483647, %v253
    %vm270 = vcmp.lt.f32.partialorder %v269, 0.0004427343
    %v271 = vsel %vm270, %v268, %v265
    %v272 = vsel %vm246, %v238, %v262
    %v273 = vsel %vm247, %v243, %v271
    %v274 = vtanh.pop %v272
    %v275 = vtanh.pop %v273
    %v276 = vmul.f32 %v238, %v274
    %v277 = vmul.f32 %v243, %v275
    %v278 = vlaneseq
    %v279 = vand.u32 %v278, 127
    %vm280 = vcmp.lt.s32.totalorder %v279, 96
    %v281 = vld [vmem:[#allocation4] sm:$0xff]
    %v282 = vld [vmem:[#allocation4 + $0x8] sm:$0xff]
    %v283 = vld [vmem:[#allocation4 + $0x10] sm:$0xff]
    %v284 = vld [vmem:[#allocation4 + $0x18] sm:$0xff]
    %v285 = vld [vmem:[#allocation4 + $0x20] sm:$0xff]
    %v286 = vld [vmem:[#allocation4 + $0x28] sm:$0xff]
    %v287 = vld [vmem:[#allocation4 + $0x30] sm:$0xff]
    %v288 = vld [vmem:[#allocation4 + $0x38] sm:$0xff]
    %v289 = vld [vmem:[#allocation4 + $0x40] sm:$0xff]
    %v290 = vld [vmem:[#allocation4 + $0x48] sm:$0xff]
    %v291 = vld [vmem:[#allocation4 + $0x50] sm:$0xff]
    %v292 = vld [vmem:[#allocation4 + $0x58] sm:$0xff]
    %v293 = vld [vmem:[#allocation4 + $0x60] sm:$0x1]
    %v294 = vlaneseq
    %v295 = vshrl.u32 %v294, 7
    %v296 = vsub.s32 0, %v295
    %v297 = vrot.slane %v293, %v296
    %v299 = vsel %vm164, %v276, 0
    %v302 = vsel %vm164, %v277, 0
    %304 = vmatprep.subr.mxu0 0.0
    %305 = vmatpush1.msra.mxu0 %v281
    %306 = vmatprep.subr.mxu0 0.0
    %307 = vmatpush1.msra.mxu0 %v282
    %308 = vmatprep.subr.mxu0 0.0
    %309 = vmatpush1.msra.mxu0 %v283
    %310 = vmatprep.subr.mxu0 0.0
    %311 = vmatpush1.msra.mxu0 %v284
    %312 = vmatprep.subr.mxu0 0.0
    %313 = vmatpush1.msra.mxu0 %v285
    %314 = vmatprep.subr.mxu0 0.0
    %315 = vmatpush1.msra.mxu0 %v286
    %316 = vmatprep.subr.mxu0 0.0
    %317 = vmatpush1.msra.mxu0 %v287
    %318 = vmatprep.subr.mxu0 0.0
    %319 = vmatpush1.msra.mxu0 %v288
    %320 = vmatprep.subr.mxu0 0.0
    %321 = vmatpush1.msra.mxu0 0.0
    %322 = vmatprep.subr.mxu0 0.0
    %323 = vmatpush1.msra.mxu0 0.0
    %324 = vmatprep.subr.mxu0 0.0
    %325 = vmatpush1.msra.mxu0 0.0
    %326 = vmatprep.subr.mxu0 0.0
    %327 = vmatpush1.msra.mxu0 0.0
    %328 = vmatprep.subr.mxu0 0.0
    %329 = vmatpush1.msra.mxu0 0.0
    %330 = vmatprep.subr.mxu0 0.0
    %331 = vmatpush1.msra.mxu0 0.0
    %332 = vmatprep.subr.mxu0 0.0
    %333 = vmatpush1.msra.mxu0 0.0
    %334 = vmatprep.subr.mxu0 0.0
    %335 = vmatpush1.msra.mxu0 0.0
    %336 = vmatprep.subr.mxu0 0.0
    %337 = vmatpush1.msra.mxu0 0.0
    %338 = vmatprep.subr.mxu0 0.0
    %339 = vmatpush1.msra.mxu0 0.0
    %340 = vmatprep.subr.mxu0 0.0
    %341 = vmatpush1.msra.mxu0 0.0
    %342 = vmatprep.subr.mxu0 0.0
    %343 = vmatpush1.msra.mxu0 0.0
    %344 = vmatprep.subr.mxu0 0.0
    %345 = vmatpush1.msra.mxu0 0.0
    %346 = vmatprep.subr.mxu0 0.0
    %347 = vmatpush1.msra.mxu0 0.0
    %348 = vmatprep.subr.mxu0 0.0
    %349 = vmatpush1.msra.mxu0 0.0
    %350 = vmatprep.subr.mxu0 0.0
    %351 = vmatpush1.msra.mxu0 0.0
    %352 = vmatprep.subr.mxu0 0.0
    %353 = vmatpush1.msra.mxu0 0.0
    %354 = vmatprep.subr.mxu0 0.0
    %355 = vmatpush1.msra.mxu0 0.0
    %356 = vmatprep.subr.mxu0 0.0
    %357 = vmatpush1.msra.mxu0 0.0
    %358 = vmatprep.subr.mxu0 0.0
    %359 = vmatpush1.msra.mxu0 0.0
    %360 = vmatprep.subr.mxu0 0.0
    %361 = vmatpush1.msra.mxu0 0.0
    %362 = vmatprep.subr.mxu0 0.0
    %363 = vmatpush1.msra.mxu0 0.0
    %364 = vmatprep.subr.mxu0 0.0
    %365 = vmatpush1.msra.mxu0 0.0
    %366 = vmatprep.subr.mxu0 0.0
    %367 = vmatpush1.msra.mxu0 0.0
    %368 = vmatprep.mubr.f32.mxu0 0.0
    %369 = vmatmul.mubr.f32.gmra.mrb[0].mxu0 %v299
    %v370 = vpop.f32.mrb[0].mxu0
    %v371 = vadd.f32 %v297, %v370
    %v372 = vpop.f32.mrb[0].mxu0
    %373 = vmatprep.mubr.f32.mxu0 0.0
    %374 = vmatmul.mubr.f32.gmra.mrb[0].mxu0 %v302
    %v375 = vpop.f32.mrb[0].mxu0
    %v376 = vadd.f32 %v297, %v375
    %v377 = vpop.f32.mrb[0].mxu0
    %378 = vdwg.mxu0
    %vm379 = vcmask 261120
    %v381 = vsel %vm379, 0.0, 0
    %383 = vmatprep.subr.mxu0 0.0
    %384 = vmatpush1.msra.mxu0 %v289
    %385 = vmatprep.subr.mxu0 0.0
    %386 = vmatpush1.msra.mxu0 %v290
    %387 = vmatprep.subr.mxu0 0.0
    %388 = vmatpush1.msra.mxu0 %v291
    %389 = vmatprep.subr.mxu0 0.0
    %390 = vmatpush1.msra.mxu0 %v292
    %391 = vmatprep.subr.mxu0 0.0
    %392 = vmatpush1.msra.mxu0 0.0
    %393 = vmatprep.subr.mxu0 0.0
    %394 = vmatpush1.msra.mxu0 0.0
    %395 = vmatprep.subr.mxu0 0.0
    %396 = vmatpush1.msra.mxu0 0.0
    %397 = vmatprep.subr.mxu0 0.0
    %398 = vmatpush1.msra.mxu0 0.0
    %399 = vmatprep.subr.mxu0 0.0
    %400 = vmatpush1.msra.mxu0 0.0
    %401 = vmatprep.subr.mxu0 0.0
    %402 = vmatpush1.msra.mxu0 0.0
    %403 = vmatprep.subr.mxu0 0.0
    %404 = vmatpush1.msra.mxu0 0.0
    %405 = vmatprep.subr.mxu0 0.0
    %406 = vmatpush1.msra.mxu0 0.0
    %407 = vmatprep.subr.mxu0 0.0
    %408 = vmatpush1.msra.mxu0 0.0
    %409 = vmatprep.subr.mxu0 0.0
    %410 = vmatpush1.msra.mxu0 0.0
    %411 = vmatprep.subr.mxu0 0.0
    %412 = vmatpush1.msra.mxu0 0.0
    %413 = vmatprep.subr.mxu0 0.0
    %414 = vmatpush1.msra.mxu0 0.0
    %415 = vmatprep.subr.mxu0 0.0
    %416 = vmatpush1.msra.mxu0 0.0
    %417 = vmatprep.subr.mxu0 0.0
    %418 = vmatpush1.msra.mxu0 0.0
    %419 = vmatprep.subr.mxu0 0.0
    %420 = vmatpush1.msra.mxu0 0.0
    %421 = vmatprep.subr.mxu0 0.0
    %422 = vmatpush1.msra.mxu0 0.0
    %423 = vmatprep.subr.mxu0 0.0
    %424 = vmatpush1.msra.mxu0 0.0
    %425 = vmatprep.subr.mxu0 0.0
    %426 = vmatpush1.msra.mxu0 0.0
    %427 = vmatprep.subr.mxu0 0.0
    %428 = vmatpush1.msra.mxu0 0.0
    %429 = vmatprep.subr.mxu0 0.0
    %430 = vmatpush1.msra.mxu0 0.0
    %431 = vmatprep.subr.mxu0 0.0
    %432 = vmatpush1.msra.mxu0 0.0
    %433 = vmatprep.subr.mxu0 0.0
    %434 = vmatpush1.msra.mxu0 0.0
    %435 = vmatprep.subr.mxu0 0.0
    %436 = vmatpush1.msra.mxu0 0.0
    %437 = vmatprep.subr.mxu0 0.0
    %438 = vmatpush1.msra.mxu0 0.0
    %439 = vmatprep.subr.mxu0 0.0
    %440 = vmatpush1.msra.mxu0 0.0
    %441 = vmatprep.subr.mxu0 0.0
    %442 = vmatpush1.msra.mxu0 0.0
    %443 = vmatprep.subr.mxu0 0.0
    %444 = vmatpush1.msra.mxu0 0.0
    %445 = vmatprep.subr.mxu0 0.0
    %446 = vmatpush1.msra.mxu0 0.0
    %447 = vmatprep.mubr.f32.mxu0 0.0
    %448 = vmatmul.mubr.f32.gmra.mrb[0].mxu0 %v381
    %v449 = vpop.f32.mrb[0].mxu0
    %v450 = vadd.f32 0.0, %v449
    %v451 = vpop.f32.mrb[0].mxu0
    %452 = vdwg.mxu0
    %v453 = vadd.f32 %v371, %v450
    %v454 = vxor.u32 %v453, 2147483648
    %v455 = vmul.f32 %v454, 1.442695
    %v456 = vpow.pop %v455
    %v457 = vadd.f32 %v456, 1.0
    %v458 = vrcp.pop %v457
    %v459 = vmul.f32 1.0, %v458
    %v460 = vtanh.pop %v453
    %v461 = vsel %vm280, %v459, %v460
    %v462 = vmul.f32 %v461, 0.0
    %464 = vrot.lane.b32.xlu0 %v461, 32
    %v465 = vpop.permute.xlu0 %464
    %v467 = vmul.f32 %v461, %v465
    %469 = vrot.lane.b32.xlu0 %v467, 32
    %v470 = vpop.permute.xlu0 %469
    %v472 = vadd.f32 %v462, %v470
    %v473 = vtanh.pop %v472
    %475 = vrot.lane.b32.xlu0 %v473, 32
    %v476 = vpop.permute.xlu0 %475
    %v478 = vmul.f32 %v461, %v476
    %480 = vrot.lane.b32.xlu0 %v478, 64
    %v481 = vpop.permute.xlu0 %480
    %vm483 = vcmask 254976
    %484 = vst.msk [vmem:[#allocation2] sm:$0x3] %vm483, %v481
    %v485 = vsel %vm379, %v481, 0
    %487 = vmatprep.subr.mxu0 0.0
    %488 = vmatpush1.msra.mxu0 %v289
    %489 = vmatprep.subr.mxu0 0.0
    %490 = vmatpush1.msra.mxu0 %v290
    %491 = vmatprep.subr.mxu0 0.0
    %492 = vmatpush1.msra.mxu0 %v291
    %493 = vmatprep.subr.mxu0 0.0
    %494 = vmatpush1.msra.mxu0 %v292
    %495 = vmatprep.subr.mxu0 0.0
    %496 = vmatpush1.msra.mxu0 0.0
    %497 = vmatprep.subr.mxu0 0.0
    %498 = vmatpush1.msra.mxu0 0.0
    %499 = vmatprep.subr.mxu0 0.0
    %500 = vmatpush1.msra.mxu0 0.0
    %501 = vmatprep.subr.mxu0 0.0
    %502 = vmatpush1.msra.mxu0 0.0
    %503 = vmatprep.subr.mxu0 0.0
    %504 = vmatpush1.msra.mxu0 0.0
    %505 = vmatprep.subr.mxu0 0.0
    %506 = vmatpush1.msra.mxu0 0.0
    %507 = vmatprep.subr.mxu0 0.0
    %508 = vmatpush1.msra.mxu0 0.0
    %509 = vmatprep.subr.mxu0 0.0
    %510 = vmatpush1.msra.mxu0 0.0
    %511 = vmatprep.subr.mxu0 0.0
    %512 = vmatpush1.msra.mxu0 0.0
    %513 = vmatprep.subr.mxu0 0.0
    %514 = vmatpush1.msra.mxu0 0.0
    %515 = vmatprep.subr.mxu0 0.0
    %516 = vmatpush1.msra.mxu0 0.0
    %517 = vmatprep.subr.mxu0 0.0
    %518 = vmatpush1.msra.mxu0 0.0
    %519 = vmatprep.subr.mxu0 0.0
    %520 = vmatpush1.msra.mxu0 0.0
    %521 = vmatprep.subr.mxu0 0.0
    %522 = vmatpush1.msra.mxu0 0.0
    %523 = vmatprep.subr.mxu0 0.0
    %524 = vmatpush1.msra.mxu0 0.0
    %525 = vmatprep.subr.mxu0 0.0
    %526 = vmatpush1.msra.mxu0 0.0
    %527 = vmatprep.subr.mxu0 0.0
    %528 = vmatpush1.msra.mxu0 0.0
    %529 = vmatprep.subr.mxu0 0.0
    %530 = vmatpush1.msra.mxu0 0.0
    %531 = vmatprep.subr.mxu0 0.0
    %532 = vmatpush1.msra.mxu0 0.0
    %533 = vmatprep.subr.mxu0 0.0
    %534 = vmatpush1.msra.mxu0 0.0
    %535 = vmatprep.subr.mxu0 0.0
    %536 = vmatpush1.msra.mxu0 0.0
    %537 = vmatprep.subr.mxu0 0.0
    %538 = vmatpush1.msra.mxu0 0.0
    %539 = vmatprep.subr.mxu0 0.0
    %540 = vmatpush1.msra.mxu0 0.0
    %541 = vmatprep.subr.mxu0 0.0
    %542 = vmatpush1.msra.mxu0 0.0
    %543 = vmatprep.subr.mxu0 0.0
    %544 = vmatpush1.msra.mxu0 0.0
    %545 = vmatprep.subr.mxu0 0.0
    %546 = vmatpush1.msra.mxu0 0.0
    %547 = vmatprep.subr.mxu0 0.0
    %548 = vmatpush1.msra.mxu0 0.0
    %549 = vmatprep.subr.mxu0 0.0
    %550 = vmatpush1.msra.mxu0 0.0
    %551 = vmatprep.mubr.f32.mxu0 0.0
    %552 = vmatmul.mubr.f32.gmra.mrb[0].mxu0 %v485
    %v553 = vpop.f32.mrb[0].mxu0
    %v554 = vadd.f32 0.0, %v553
    %v555 = vpop.f32.mrb[0].mxu0
    %556 = vdwg.mxu0
    %v558 = vrot.slane %v554, 6
    %v560 = vadd.f32 %v371, %v558
    %v561 = vxor.u32 %v560, 2147483648
    %v562 = vmul.f32 %v561, 1.442695
    %v563 = vpow.pop %v562
    %v564 = vadd.f32 %v563, 1.0
    %v565 = vrcp.pop %v564
    %v566 = vmul.f32 1.0, %v565
    %v567 = vtanh.pop %v560
    %v568 = vsel %vm280, %v566, %v567
    %v570 = vrot.slane %v472, 6
    %v572 = vmul.f32 %v568, %v570
    %574 = vrot.lane.b32.xlu0 %v568, 32
    %v575 = vpop.permute.xlu0 %574
    %v577 = vmul.f32 %v568, %v575
    %579 = vrot.lane.b32.xlu0 %v577, 32
    %v580 = vpop.permute.xlu0 %579
    %v582 = vadd.f32 %v572, %v580
    %v583 = vtanh.pop %v582
    %585 = vrot.lane.b32.xlu0 %v583, 32
    %v586 = vpop.permute.xlu0 %585
    %v588 = vmul.f32 %v568, %v586
    %590 = vrot.lane.b32.xlu0 %v588, 64
    %v591 = vpop.permute.xlu0 %590
    %vm593 = vcmask 257026
    %594 = vst.msk [vmem:[#allocation2] sm:$0xc] %vm593, %v591
    %v595 = vrot.slane %v588, 2
    %596 = vrot.lane.b32.xlu0 %v595, 64
    %v597 = vpop.permute.xlu0 %596
    %v598 = vsel %vm379, %v597, 0
    %600 = vmatprep.subr.mxu0 0.0
    %601 = vmatpush1.msra.mxu0 %v289
    %602 = vmatprep.subr.mxu0 0.0
    %603 = vmatpush1.msra.mxu0 %v290
    %604 = vmatprep.subr.mxu0 0.0
    %605 = vmatpush1.msra.mxu0 %v291
    %606 = vmatprep.subr.mxu0 0.0
    %607 = vmatpush1.msra.mxu0 %v292
    %608 = vmatprep.subr.mxu0 0.0
    %609 = vmatpush1.msra.mxu0 0.0
    %610 = vmatprep.subr.mxu0 0.0
    %611 = vmatpush1.msra.mxu0 0.0
    %612 = vmatprep.subr.mxu0 0.0
    %613 = vmatpush1.msra.mxu0 0.0
    %614 = vmatprep.subr.mxu0 0.0
    %615 = vmatpush1.msra.mxu0 0.0
    %616 = vmatprep.subr.mxu0 0.0
    %617 = vmatpush1.msra.mxu0 0.0
    %618 = vmatprep.subr.mxu0 0.0
    %619 = vmatpush1.msra.mxu0 0.0
    %620 = vmatprep.subr.mxu0 0.0
    %621 = vmatpush1.msra.mxu0 0.0
    %622 = vmatprep.subr.mxu0 0.0
    %623 = vmatpush1.msra.mxu0 0.0
    %624 = vmatprep.subr.mxu0 0.0
    %625 = vmatpush1.msra.mxu0 0.0
    %626 = vmatprep.subr.mxu0 0.0
    %627 = vmatpush1.msra.mxu0 0.0
    %628 = vmatprep.subr.mxu0 0.0
    %629 = vmatpush1.msra.mxu0 0.0
    %630 = vmatprep.subr.mxu0 0.0
    %631 = vmatpush1.msra.mxu0 0.0
    %632 = vmatprep.subr.mxu0 0.0
    %633 = vmatpush1.msra.mxu0 0.0
    %634 = vmatprep.subr.mxu0 0.0
    %635 = vmatpush1.msra.mxu0 0.0
    %636 = vmatprep.subr.mxu0 0.0
    %637 = vmatpush1.msra.mxu0 0.0
    %638 = vmatprep.subr.mxu0 0.0
    %639 = vmatpush1.msra.mxu0 0.0
    %640 = vmatprep.subr.mxu0 0.0
    %641 = vmatpush1.msra.mxu0 0.0
    %642 = vmatprep.subr.mxu0 0.0
    %643 = vmatpush1.msra.mxu0 0.0
    %644 = vmatprep.subr.mxu0 0.0
    %645 = vmatpush1.msra.mxu0 0.0
    %646 = vmatprep.subr.mxu0 0.0
    %647 = vmatpush1.msra.mxu0 0.0
    %648 = vmatprep.subr.mxu0 0.0
    %649 = vmatpush1.msra.mxu0 0.0
    %650 = vmatprep.subr.mxu0 0.0
    %651 = vmatpush1.msra.mxu0 0.0
    %652 = vmatprep.subr.mxu0 0.0
    %653 = vmatpush1.msra.mxu0 0.0
    %654 = vmatprep.subr.mxu0 0.0
    %655 = vmatpush1.msra.mxu0 0.0
    %656 = vmatprep.subr.mxu0 0.0
    %657 = vmatpush1.msra.mxu0 0.0
    %658 = vmatprep.subr.mxu0 0.0
    %659 = vmatpush1.msra.mxu0 0.0
    %660 = vmatprep.subr.mxu0 0.0
    %661 = vmatpush1.msra.mxu0 0.0
    %662 = vmatprep.subr.mxu0 0.0
    %663 = vmatpush1.msra.mxu0 0.0
    %664 = vmatprep.mubr.f32.mxu0 0.0
    %665 = vmatmul.mubr.f32.gmra.mrb[0].mxu0 %v598
    %v666 = vpop.f32.mrb[0].mxu0
    %v667 = vadd.f32 0.0, %v666
    %v668 = vpop.f32.mrb[0].mxu0
    %669 = vdwg.mxu0
    %v671 = vrot.slane %v667, 4
    %v673 = vadd.f32 %v371, %v671
    %v674 = vxor.u32 %v673, 2147483648
    %v675 = vmul.f32 %v674, 1.442695
    %v676 = vpow.pop %v675
    %v677 = vadd.f32 %v676, 1.0
    %v678 = vrcp.pop %v677
    %v679 = vmul.f32 1.0, %v678
    %v680 = vtanh.pop %v673
    %v681 = vsel %vm280, %v679, %v680
    %v683 = vrot.slane %v582, 6
    %v685 = vmul.f32 %v681, %v683
    %687 = vrot.lane.b32.xlu0 %v681, 32
    %v688 = vpop.permute.xlu0 %687
    %v690 = vmul.f32 %v681, %v688
    %692 = vrot.lane.b32.xlu0 %v690, 32
    %v693 = vpop.permute.xlu0 %692
    %v695 = vadd.f32 %v685, %v693
    %v696 = vtanh.pop %v695
    %698 = vrot.lane.b32.xlu0 %v696, 32
    %v699 = vpop.permute.xlu0 %698
    %v701 = vmul.f32 %v681, %v699
    %703 = vrot.lane.b32.xlu0 %v701, 64
    %v704 = vpop.permute.xlu0 %703
    %vm706 = vcmask 259076
    %707 = vst.msk [vmem:[#allocation2] sm:$0x30] %vm706, %v704
    %v708 = vrot.slane %v701, 4
    %709 = vrot.lane.b32.xlu0 %v708, 64
    %v710 = vpop.permute.xlu0 %709
    %v711 = vsel %vm379, %v710, 0
    %713 = vmatprep.subr.mxu0 0.0
    %714 = vmatpush1.msra.mxu0 %v289
    %715 = vmatprep.subr.mxu0 0.0
    %716 = vmatpush1.msra.mxu0 %v290
    %717 = vmatprep.subr.mxu0 0.0
    %718 = vmatpush1.msra.mxu0 %v291
    %719 = vmatprep.subr.mxu0 0.0
    %720 = vmatpush1.msra.mxu0 %v292
    %721 = vmatprep.subr.mxu0 0.0
    %722 = vmatpush1.msra.mxu0 0.0
    %723 = vmatprep.subr.mxu0 0.0
    %724 = vmatpush1.msra.mxu0 0.0
    %725 = vmatprep.subr.mxu0 0.0
    %726 = vmatpush1.msra.mxu0 0.0
    %727 = vmatprep.subr.mxu0 0.0
    %728 = vmatpush1.msra.mxu0 0.0
    %729 = vmatprep.subr.mxu0 0.0
    %730 = vmatpush1.msra.mxu0 0.0
    %731 = vmatprep.subr.mxu0 0.0
    %732 = vmatpush1.msra.mxu0 0.0
    %733 = vmatprep.subr.mxu0 0.0
    %734 = vmatpush1.msra.mxu0 0.0
    %735 = vmatprep.subr.mxu0 0.0
    %736 = vmatpush1.msra.mxu0 0.0
    %737 = vmatprep.subr.mxu0 0.0
    %738 = vmatpush1.msra.mxu0 0.0
    %739 = vmatprep.subr.mxu0 0.0
    %740 = vmatpush1.msra.mxu0 0.0
    %741 = vmatprep.subr.mxu0 0.0
    %742 = vmatpush1.msra.mxu0 0.0
    %743 = vmatprep.subr.mxu0 0.0
    %744 = vmatpush1.msra.mxu0 0.0
    %745 = vmatprep.subr.mxu0 0.0
    %746 = vmatpush1.msra.mxu0 0.0
    %747 = vmatprep.subr.mxu0 0.0
    %748 = vmatpush1.msra.mxu0 0.0
    %749 = vmatprep.subr.mxu0 0.0
    %750 = vmatpush1.msra.mxu0 0.0
    %751 = vmatprep.subr.mxu0 0.0
    %752 = vmatpush1.msra.mxu0 0.0
    %753 = vmatprep.subr.mxu0 0.0
    %754 = vmatpush1.msra.mxu0 0.0
    %755 = vmatprep.subr.mxu0 0.0
    %756 = vmatpush1.msra.mxu0 0.0
    %757 = vmatprep.subr.mxu0 0.0
    %758 = vmatpush1.msra.mxu0 0.0
    %759 = vmatprep.subr.mxu0 0.0
    %760 = vmatpush1.msra.mxu0 0.0
    %761 = vmatprep.subr.mxu0 0.0
    %762 = vmatpush1.msra.mxu0 0.0
    %763 = vmatprep.subr.mxu0 0.0
    %764 = vmatpush1.msra.mxu0 0.0
    %765 = vmatprep.subr.mxu0 0.0
    %766 = vmatpush1.msra.mxu0 0.0
    %767 = vmatprep.subr.mxu0 0.0
    %768 = vmatpush1.msra.mxu0 0.0
    %769 = vmatprep.subr.mxu0 0.0
    %770 = vmatpush1.msra.mxu0 0.0
    %771 = vmatprep.subr.mxu0 0.0
    %772 = vmatpush1.msra.mxu0 0.0
    %773 = vmatprep.subr.mxu0 0.0
    %774 = vmatpush1.msra.mxu0 0.0
    %775 = vmatprep.subr.mxu0 0.0
    %776 = vmatpush1.msra.mxu0 0.0
    %777 = vmatprep.mubr.f32.mxu0 0.0
    %778 = vmatmul.mubr.f32.gmra.mrb[0].mxu0 %v711
    %v779 = vpop.f32.mrb[0].mxu0
    %v780 = vadd.f32 0.0, %v779
    %v781 = vpop.f32.mrb[0].mxu0
    %782 = vdwg.mxu0
    %v784 = vrot.slane %v780, 2
    %v786 = vadd.f32 %v371, %v784
    %v787 = vxor.u32 %v786, 2147483648
    %v788 = vmul.f32 %v787, 1.442695
    %v789 = vpow.pop %v788
    %v790 = vadd.f32 %v789, 1.0
    %v791 = vrcp.pop %v790
    %v792 = vmul.f32 1.0, %v791
    %v793 = vtanh.pop %v786
    %v794 = vsel %vm280, %v792, %v793
    %v796 = vrot.slane %v695, 6
    %v798 = vmul.f32 %v794, %v796
    %800 = vrot.lane.b32.xlu0 %v794, 32
    %v801 = vpop.permute.xlu0 %800
    %v803 = vmul.f32 %v794, %v801
    %805 = vrot.lane.b32.xlu0 %v803, 32
    %v806 = vpop.permute.xlu0 %805
    %v808 = vadd.f32 %v798, %v806
    %v809 = vtanh.pop %v808
    %811 = vrot.lane.b32.xlu0 %v809, 32
    %v812 = vpop.permute.xlu0 %811
    %v814 = vmul.f32 %v794, %v812
    %816 = vrot.lane.b32.xlu0 %v814, 64
    %v817 = vpop.permute.xlu0 %816
    %vm819 = vcmask 261126
    %820 = vst.msk [vmem:[#allocation2] sm:$0xc0] %vm819, %v817
    %v821 = vrot.slane %v814, 6
    %822 = vrot.lane.b32.xlu0 %v821, 64
    %v823 = vpop.permute.xlu0 %822
    %v824 = vsel %vm379, %v823, 0
    %826 = vmatprep.subr.mxu0 0.0
    %827 = vmatpush1.msra.mxu0 %v289
    %828 = vmatprep.subr.mxu0 0.0
    %829 = vmatpush1.msra.mxu0 %v290
    %830 = vmatprep.subr.mxu0 0.0
    %831 = vmatpush1.msra.mxu0 %v291
    %832 = vmatprep.subr.mxu0 0.0
    %833 = vmatpush1.msra.mxu0 %v292
    %834 = vmatprep.subr.mxu0 0.0
    %835 = vmatpush1.msra.mxu0 0.0
    %836 = vmatprep.subr.mxu0 0.0
    %837 = vmatpush1.msra.mxu0 0.0
    %838 = vmatprep.subr.mxu0 0.0
    %839 = vmatpush1.msra.mxu0 0.0
    %840 = vmatprep.subr.mxu0 0.0
    %841 = vmatpush1.msra.mxu0 0.0
    %842 = vmatprep.subr.mxu0 0.0
    %843 = vmatpush1.msra.mxu0 0.0
    %844 = vmatprep.subr.mxu0 0.0
    %845 = vmatpush1.msra.mxu0 0.0
    %846 = vmatprep.subr.mxu0 0.0
    %847 = vmatpush1.msra.mxu0 0.0
    %848 = vmatprep.subr.mxu0 0.0
    %849 = vmatpush1.msra.mxu0 0.0
    %850 = vmatprep.subr.mxu0 0.0
    %851 = vmatpush1.msra.mxu0 0.0
    %852 = vmatprep.subr.mxu0 0.0
    %853 = vmatpush1.msra.mxu0 0.0
    %854 = vmatprep.subr.mxu0 0.0
    %855 = vmatpush1.msra.mxu0 0.0
    %856 = vmatprep.subr.mxu0 0.0
    %857 = vmatpush1.msra.mxu0 0.0
    %858 = vmatprep.subr.mxu0 0.0
    %859 = vmatpush1.msra.mxu0 0.0
    %860 = vmatprep.subr.mxu0 0.0
    %861 = vmatpush1.msra.mxu0 0.0
    %862 = vmatprep.subr.mxu0 0.0
    %863 = vmatpush1.msra.mxu0 0.0
    %864 = vmatprep.subr.mxu0 0.0
    %865 = vmatpush1.msra.mxu0 0.0
    %866 = vmatprep.subr.mxu0 0.0
    %867 = vmatpush1.msra.mxu0 0.0
    %868 = vmatprep.subr.mxu0 0.0
    %869 = vmatpush1.msra.mxu0 0.0
    %870 = vmatprep.subr.mxu0 0.0
    %871 = vmatpush1.msra.mxu0 0.0
    %872 = vmatprep.subr.mxu0 0.0
    %873 = vmatpush1.msra.mxu0 0.0
    %874 = vmatprep.subr.mxu0 0.0
    %875 = vmatpush1.msra.mxu0 0.0
    %876 = vmatprep.subr.mxu0 0.0
    %877 = vmatpush1.msra.mxu0 0.0
    %878 = vmatprep.subr.mxu0 0.0
    %879 = vmatpush1.msra.mxu0 0.0
    %880 = vmatprep.subr.mxu0 0.0
    %881 = vmatpush1.msra.mxu0 0.0
    %882 = vmatprep.subr.mxu0 0.0
    %883 = vmatpush1.msra.mxu0 0.0
    %884 = vmatprep.subr.mxu0 0.0
    %885 = vmatpush1.msra.mxu0 0.0
    %886 = vmatprep.subr.mxu0 0.0
    %887 = vmatpush1.msra.mxu0 0.0
    %888 = vmatprep.subr.mxu0 0.0
    %889 = vmatpush1.msra.mxu0 0.0
    %890 = vmatprep.mubr.f32.mxu0 0.0
    %891 = vmatmul.mubr.f32.gmra.mrb[0].mxu0 %v824
    %v892 = vpop.f32.mrb[0].mxu0
    %v893 = vadd.f32 0.0, %v892
    %v894 = vpop.f32.mrb[0].mxu0
    %895 = vdwg.mxu0
    %v896 = vadd.f32 %v376, %v893
    %v897 = vxor.u32 %v896, 2147483648
    %v898 = vmul.f32 %v897, 1.442695
    %v899 = vpow.pop %v898
    %v900 = vadd.f32 %v899, 1.0
    %v901 = vrcp.pop %v900
    %v902 = vmul.f32 1.0, %v901
    %v903 = vtanh.pop %v896
    %v904 = vsel %vm280, %v902, %v903
    %v906 = vrot.slane %v808, 6
    %v908 = vmul.f32 %v904, %v906
    %910 = vrot.lane.b32.xlu0 %v904, 32
    %v911 = vpop.permute.xlu0 %910
    %v913 = vmul.f32 %v904, %v911
    %915 = vrot.lane.b32.xlu0 %v913, 32
    %v916 = vpop.permute.xlu0 %915
    %v918 = vadd.f32 %v908, %v916
    %v919 = vtanh.pop %v918
    %921 = vrot.lane.b32.xlu0 %v919, 32
    %v922 = vpop.permute.xlu0 %921
    %v924 = vmul.f32 %v904, %v922
    %926 = vrot.lane.b32.xlu0 %v924, 64
    %v927 = vpop.permute.xlu0 %926
    %929 = vst.msk [vmem:[#allocation2 + $0x8] sm:$0x3] %vm483, %v927
    %v930 = vsel %vm379, %v927, 0
    %932 = vmatprep.subr.mxu0 0.0
    %933 = vmatpush1.msra.mxu0 %v289
    %934 = vmatprep.subr.mxu0 0.0
    %935 = vmatpush1.msra.mxu0 %v290
    %936 = vmatprep.subr.mxu0 0.0
    %937 = vmatpush1.msra.mxu0 %v291
    %938 = vmatprep.subr.mxu0 0.0
    %939 = vmatpush1.msra.mxu0 %v292
    %940 = vmatprep.subr.mxu0 0.0
    %941 = vmatpush1.msra.mxu0 0.0
    %942 = vmatprep.subr.mxu0 0.0
    %943 = vmatpush1.msra.mxu0 0.0
    %944 = vmatprep.subr.mxu0 0.0
    %945 = vmatpush1.msra.mxu0 0.0
    %946 = vmatprep.subr.mxu0 0.0
    %947 = vmatpush1.msra.mxu0 0.0
    %948 = vmatprep.subr.mxu0 0.0
    %949 = vmatpush1.msra.mxu0 0.0
    %950 = vmatprep.subr.mxu0 0.0
    %951 = vmatpush1.msra.mxu0 0.0
    %952 = vmatprep.subr.mxu0 0.0
    %953 = vmatpush1.msra.mxu0 0.0
    %954 = vmatprep.subr.mxu0 0.0
    %955 = vmatpush1.msra.mxu0 0.0
    %956 = vmatprep.subr.mxu0 0.0
    %957 = vmatpush1.msra.mxu0 0.0
    %958 = vmatprep.subr.mxu0 0.0
    %959 = vmatpush1.msra.mxu0 0.0
    %960 = vmatprep.subr.mxu0 0.0
    %961 = vmatpush1.msra.mxu0 0.0
    %962 = vmatprep.subr.mxu0 0.0
    %963 = vmatpush1.msra.mxu0 0.0
    %964 = vmatprep.subr.mxu0 0.0
    %965 = vmatpush1.msra.mxu0 0.0
    %966 = vmatprep.subr.mxu0 0.0
    %967 = vmatpush1.msra.mxu0 0.0
    %968 = vmatprep.subr.mxu0 0.0
    %969 = vmatpush1.msra.mxu0 0.0
    %970 = vmatprep.subr.mxu0 0.0
    %971 = vmatpush1.msra.mxu0 0.0
    %972 = vmatprep.subr.mxu0 0.0
    %973 = vmatpush1.msra.mxu0 0.0
    %974 = vmatprep.subr.mxu0 0.0
    %975 = vmatpush1.msra.mxu0 0.0
    %976 = vmatprep.subr.mxu0 0.0
    %977 = vmatpush1.msra.mxu0 0.0
    %978 = vmatprep.subr.mxu0 0.0
    %979 = vmatpush1.msra.mxu0 0.0
    %980 = vmatprep.subr.mxu0 0.0
    %981 = vmatpush1.msra.mxu0 0.0
    %982 = vmatprep.subr.mxu0 0.0
    %983 = vmatpush1.msra.mxu0 0.0
    %984 = vmatprep.subr.mxu0 0.0
    %985 = vmatpush1.msra.mxu0 0.0
    %986 = vmatprep.subr.mxu0 0.0
    %987 = vmatpush1.msra.mxu0 0.0
    %988 = vmatprep.subr.mxu0 0.0
    %989 = vmatpush1.msra.mxu0 0.0
    %990 = vmatprep.subr.mxu0 0.0
    %991 = vmatpush1.msra.mxu0 0.0
    %992 = vmatprep.subr.mxu0 0.0
    %993 = vmatpush1.msra.mxu0 0.0
    %994 = vmatprep.subr.mxu0 0.0
    %995 = vmatpush1.msra.mxu0 0.0
    %996 = vmatprep.mubr.f32.mxu0 0.0
    %997 = vmatmul.mubr.f32.gmra.mrb[0].mxu0 %v930
    %v998 = vpop.f32.mrb[0].mxu0
    %v999 = vadd.f32 0.0, %v998
    %v1000 = vpop.f32.mrb[0].mxu0
    %1001 = vdwg.mxu0
    %v1003 = vrot.slane %v999, 6
    %v1005 = vadd.f32 %v376, %v1003
    %v1006 = vxor.u32 %v1005, 2147483648
    %v1007 = vmul.f32 %v1006, 1.442695
    %v1008 = vpow.pop %v1007
    %v1009 = vadd.f32 %v1008, 1.0
    %v1010 = vrcp.pop %v1009
    %v1011 = vmul.f32 1.0, %v1010
    %v1012 = vtanh.pop %v1005
    %v1013 = vsel %vm280, %v1011, %v1012
    %v1015 = vrot.slane %v918, 6
    %v1017 = vmul.f32 %v1013, %v1015
    %1019 = vrot.lane.b32.xlu0 %v1013, 32
    %v1020 = vpop.permute.xlu0 %1019
    %v1022 = vmul.f32 %v1013, %v1020
    %1024 = vrot.lane.b32.xlu0 %v1022, 32
    %v1025 = vpop.permute.xlu0 %1024
    %v1027 = vadd.f32 %v1017, %v1025
    %v1028 = vtanh.pop %v1027
    %1030 = vrot.lane.b32.xlu0 %v1028, 32
    %v1031 = vpop.permute.xlu0 %1030
    %v1033 = vmul.f32 %v1013, %v1031
    %1035 = vrot.lane.b32.xlu0 %v1033, 64
    %v1036 = vpop.permute.xlu0 %1035
    %1038 = vst.msk [vmem:[#allocation2 + $0x8] sm:$0xc] %vm593, %v1036
    %v1039 = vrot.slane %v1033, 2
    %1040 = vrot.lane.b32.xlu0 %v1039, 64
    %v1041 = vpop.permute.xlu0 %1040
    %v1042 = vsel %vm379, %v1041, 0
    %1044 = vmatprep.subr.mxu0 0.0
    %1045 = vmatpush1.msra.mxu0 %v289
    %1046 = vmatprep.subr.mxu0 0.0
    %1047 = vmatpush1.msra.mxu0 %v290
    %1048 = vmatprep.subr.mxu0 0.0
    %1049 = vmatpush1.msra.mxu0 %v291
    %1050 = vmatprep.subr.mxu0 0.0
    %1051 = vmatpush1.msra.mxu0 %v292
    %1052 = vmatprep.subr.mxu0 0.0
    %1053 = vmatpush1.msra.mxu0 0.0
    %1054 = vmatprep.subr.mxu0 0.0
    %1055 = vmatpush1.msra.mxu0 0.0
    %1056 = vmatprep.subr.mxu0 0.0
    %1057 = vmatpush1.msra.mxu0 0.0
    %1058 = vmatprep.subr.mxu0 0.0
    %1059 = vmatpush1.msra.mxu0 0.0
    %1060 = vmatprep.subr.mxu0 0.0
    %1061 = vmatpush1.msra.mxu0 0.0
    %1062 = vmatprep.subr.mxu0 0.0
    %1063 = vmatpush1.msra.mxu0 0.0
    %1064 = vmatprep.subr.mxu0 0.0
    %1065 = vmatpush1.msra.mxu0 0.0
    %1066 = vmatprep.subr.mxu0 0.0
    %1067 = vmatpush1.msra.mxu0 0.0
    %1068 = vmatprep.subr.mxu0 0.0
    %1069 = vmatpush1.msra.mxu0 0.0
    %1070 = vmatprep.subr.mxu0 0.0
    %1071 = vmatpush1.msra.mxu0 0.0
    %1072 = vmatprep.subr.mxu0 0.0
    %1073 = vmatpush1.msra.mxu0 0.0
    %1074 = vmatprep.subr.mxu0 0.0
    %1075 = vmatpush1.msra.mxu0 0.0
    %1076 = vmatprep.subr.mxu0 0.0
    %1077 = vmatpush1.msra.mxu0 0.0
    %1078 = vmatprep.subr.mxu0 0.0
    %1079 = vmatpush1.msra.mxu0 0.0
    %1080 = vmatprep.subr.mxu0 0.0
    %1081 = vmatpush1.msra.mxu0 0.0
    %1082 = vmatprep.subr.mxu0 0.0
    %1083 = vmatpush1.msra.mxu0 0.0
    %1084 = vmatprep.subr.mxu0 0.0
    %1085 = vmatpush1.msra.mxu0 0.0
    %1086 = vmatprep.subr.mxu0 0.0
    %1087 = vmatpush1.msra.mxu0 0.0
    %1088 = vmatprep.subr.mxu0 0.0
    %1089 = vmatpush1.msra.mxu0 0.0
    %1090 = vmatprep.subr.mxu0 0.0
    %1091 = vmatpush1.msra.mxu0 0.0
    %1092 = vmatprep.subr.mxu0 0.0
    %1093 = vmatpush1.msra.mxu0 0.0
    %1094 = vmatprep.subr.mxu0 0.0
    %1095 = vmatpush1.msra.mxu0 0.0
    %1096 = vmatprep.subr.mxu0 0.0
    %1097 = vmatpush1.msra.mxu0 0.0
    %1098 = vmatprep.subr.mxu0 0.0
    %1099 = vmatpush1.msra.mxu0 0.0
    %1100 = vmatprep.subr.mxu0 0.0
    %1101 = vmatpush1.msra.mxu0 0.0
    %1102 = vmatprep.subr.mxu0 0.0
    %1103 = vmatpush1.msra.mxu0 0.0
    %1104 = vmatprep.subr.mxu0 0.0
    %1105 = vmatpush1.msra.mxu0 0.0
    %1106 = vmatprep.subr.mxu0 0.0
    %1107 = vmatpush1.msra.mxu0 0.0
    %1108 = vmatprep.mubr.f32.mxu0 0.0
    %1109 = vmatmul.mubr.f32.gmra.mrb[0].mxu0 %v1042
    %v1110 = vpop.f32.mrb[0].mxu0
    %v1111 = vadd.f32 0.0, %v1110
    %v1112 = vpop.f32.mrb[0].mxu0
    %1113 = vdwg.mxu0
    %v1115 = vrot.slane %v1111, 4
    %v1117 = vadd.f32 %v376, %v1115
    %v1118 = vxor.u32 %v1117, 2147483648
    %v1119 = vmul.f32 %v1118, 1.442695
    %v1120 = vpow.pop %v1119
    %v1121 = vadd.f32 %v1120, 1.0
    %v1122 = vrcp.pop %v1121
    %v1123 = vmul.f32 1.0, %v1122
    %v1124 = vtanh.pop %v1117
    %v1125 = vsel %vm280, %v1123, %v1124
    %v1127 = vrot.slane %v1027, 6
    %v1129 = vmul.f32 %v1125, %v1127
    %1131 = vrot.lane.b32.xlu0 %v1125, 32
    %v1132 = vpop.permute.xlu0 %1131
    %v1134 = vmul.f32 %v1125, %v1132
    %1136 = vrot.lane.b32.xlu0 %v1134, 32
    %v1137 = vpop.permute.xlu0 %1136
    %v1139 = vadd.f32 %v1129, %v1137
    %v1140 = vtanh.pop %v1139
    %1142 = vrot.lane.b32.xlu0 %v1140, 32
    %v1143 = vpop.permute.xlu0 %1142
    %v1145 = vmul.f32 %v1125, %v1143
    %1147 = vrot.lane.b32.xlu0 %v1145, 64
    %v1148 = vpop.permute.xlu0 %1147
    %1150 = vst.msk [vmem:[#allocation2 + $0x8] sm:$0x30] %vm706, %v1148
    %v1151 = vrot.slane %v1145, 4
    %1152 = vrot.lane.b32.xlu0 %v1151, 64
    %v1153 = vpop.permute.xlu0 %1152
    %v1154 = vsel %vm379, %v1153, 0
    %1156 = vmatprep.subr.mxu0 0.0
    %1157 = vmatpush1.msra.mxu0 %v289
    %1158 = vmatprep.subr.mxu0 0.0
    %1159 = vmatpush1.msra.mxu0 %v290
    %1160 = vmatprep.subr.mxu0 0.0
    %1161 = vmatpush1.msra.mxu0 %v291
    %1162 = vmatprep.subr.mxu0 0.0
    %1163 = vmatpush1.msra.mxu0 %v292
    %1164 = vmatprep.subr.mxu0 0.0
    %1165 = vmatpush1.msra.mxu0 0.0
    %1166 = vmatprep.subr.mxu0 0.0
    %1167 = vmatpush1.msra.mxu0 0.0
    %1168 = vmatprep.subr.mxu0 0.0
    %1169 = vmatpush1.msra.mxu0 0.0
    %1170 = vmatprep.subr.mxu0 0.0
    %1171 = vmatpush1.msra.mxu0 0.0
    %1172 = vmatprep.subr.mxu0 0.0
    %1173 = vmatpush1.msra.mxu0 0.0
    %1174 = vmatprep.subr.mxu0 0.0
    %1175 = vmatpush1.msra.mxu0 0.0
    %1176 = vmatprep.subr.mxu0 0.0
    %1177 = vmatpush1.msra.mxu0 0.0
    %1178 = vmatprep.subr.mxu0 0.0
    %1179 = vmatpush1.msra.mxu0 0.0
    %1180 = vmatprep.subr.mxu0 0.0
    %1181 = vmatpush1.msra.mxu0 0.0
    %1182 = vmatprep.subr.mxu0 0.0
    %1183 = vmatpush1.msra.mxu0 0.0
    %1184 = vmatprep.subr.mxu0 0.0
    %1185 = vmatpush1.msra.mxu0 0.0
    %1186 = vmatprep.subr.mxu0 0.0
    %1187 = vmatpush1.msra.mxu0 0.0
    %1188 = vmatprep.subr.mxu0 0.0
    %1189 = vmatpush1.msra.mxu0 0.0
    %1190 = vmatprep.subr.mxu0 0.0
    %1191 = vmatpush1.msra.mxu0 0.0
    %1192 = vmatprep.subr.mxu0 0.0
    %1193 = vmatpush1.msra.mxu0 0.0
    %1194 = vmatprep.subr.mxu0 0.0
    %1195 = vmatpush1.msra.mxu0 0.0
    %1196 = vmatprep.subr.mxu0 0.0
    %1197 = vmatpush1.msra.mxu0 0.0
    %1198 = vmatprep.subr.mxu0 0.0
    %1199 = vmatpush1.msra.mxu0 0.0
    %1200 = vmatprep.subr.mxu0 0.0
    %1201 = vmatpush1.msra.mxu0 0.0
    %1202 = vmatprep.subr.mxu0 0.0
    %1203 = vmatpush1.msra.mxu0 0.0
    %1204 = vmatprep.subr.mxu0 0.0
    %1205 = vmatpush1.msra.mxu0 0.0
    %1206 = vmatprep.subr.mxu0 0.0
    %1207 = vmatpush1.msra.mxu0 0.0
    %1208 = vmatprep.subr.mxu0 0.0
    %1209 = vmatpush1.msra.mxu0 0.0
    %1210 = vmatprep.subr.mxu0 0.0
    %1211 = vmatpush1.msra.mxu0 0.0
    %1212 = vmatprep.subr.mxu0 0.0
    %1213 = vmatpush1.msra.mxu0 0.0
    %1214 = vmatprep.subr.mxu0 0.0
    %1215 = vmatpush1.msra.mxu0 0.0
    %1216 = vmatprep.subr.mxu0 0.0
    %1217 = vmatpush1.msra.mxu0 0.0
    %1218 = vmatprep.subr.mxu0 0.0
    %1219 = vmatpush1.msra.mxu0 0.0
    %1220 = vmatprep.mubr.f32.mxu0 0.0
    %1221 = vmatmul.mubr.f32.gmra.mrb[0].mxu0 %v1154
    %v1222 = vpop.f32.mrb[0].mxu0
    %v1223 = vadd.f32 0.0, %v1222
    %v1224 = vpop.f32.mrb[0].mxu0
    %1225 = vdwg.mxu0
    %v1227 = vrot.slane %v1223, 2
    %v1229 = vadd.f32 %v376, %v1227
    %v1230 = vxor.u32 %v1229, 2147483648
    %v1231 = vmul.f32 %v1230, 1.442695
    %v1232 = vpow.pop %v1231
    %v1233 = vadd.f32 %v1232, 1.0
    %v1234 = vrcp.pop %v1233
    %v1235 = vmul.f32 1.0, %v1234
    %v1236 = vtanh.pop %v1229
    %v1237 = vsel %vm280, %v1235, %v1236
    %v1239 = vrot.slane %v1139, 6
    %v1241 = vmul.f32 %v1237, %v1239
    %1243 = vrot.lane.b32.xlu0 %v1237, 32
    %v1244 = vpop.permute.xlu0 %1243
    %v1246 = vmul.f32 %v1237, %v1244
    %1248 = vrot.lane.b32.xlu0 %v1246, 32
    %v1249 = vpop.permute.xlu0 %1248
    %v1251 = vadd.f32 %v1241, %v1249
    %v1252 = vtanh.pop %v1251
    %1254 = vrot.lane.b32.xlu0 %v1252, 32
    %v1255 = vpop.permute.xlu0 %1254
    %v1257 = vmul.f32 %v1237, %v1255
    %1259 = vrot.lane.b32.xlu0 %v1257, 64
    %v1260 = vpop.permute.xlu0 %1259
    %1262 = vst.msk [vmem:[#allocation2 + $0x8] sm:$0xc0] %vm819, %v1260
    %v1263 = vld [vmem:[#allocation2] sm:$0xff]
    %v1264 = vld [vmem:[#allocation2 + $0x8] sm:$0xff]
    %v1265 = vld [vmem:[#allocation4 + $0x68] sm:$0xff]
    %v1266 = vld [vmem:[#allocation4 + $0x70] sm:$0xff]
    %v1267 = vld [vmem:[#allocation4 + $0x78] sm:$0xff]
    %v1268 = vld [vmem:[#allocation4 + $0x80] sm:$0xff]
    %v1269 = vld [vmem:[#allocation4 + $0x88] sm:$0xff]
    %v1270 = vld [vmem:[#allocation4 + $0x90] sm:$0xff]
    %v1271 = vld [vmem:[#allocation4 + $0x98] sm:$0xff]
    %v1272 = vld [vmem:[#allocation4 + $0xa0] sm:$0xff]
    %v1273 = vld [vmem:[#allocation4 + $0xa8] sm:$0x1]
    %v1274 = vlaneseq
    %v1275 = vshrl.u32 %v1274, 7
    %v1276 = vsub.s32 0, %v1275
    %v1277 = vrot.slane %v1273, %v1276
    %v1279 = vsel %vm379, %v1263, 0
    %v1282 = vsel %vm379, %v1264, 0
    %1284 = vmatprep.subr.mxu0 0.0
    %1285 = vmatpush1.msra.mxu0 %v1265
    %1286 = vmatprep.subr.mxu0 0.0
    %1287 = vmatpush1.msra.mxu0 %v1266
    %1288 = vmatprep.subr.mxu0 0.0
    %1289 = vmatpush1.msra.mxu0 %v1267
    %1290 = vmatprep.subr.mxu0 0.0
    %1291 = vmatpush1.msra.mxu0 %v1268
    %1292 = vmatprep.subr.mxu0 0.0
    %1293 = vmatpush1.msra.mxu0 0.0
    %1294 = vmatprep.subr.mxu0 0.0
    %1295 = vmatpush1.msra.mxu0 0.0
    %1296 = vmatprep.subr.mxu0 0.0
    %1297 = vmatpush1.msra.mxu0 0.0
    %1298 = vmatprep.subr.mxu0 0.0
    %1299 = vmatpush1.msra.mxu0 0.0
    %1300 = vmatprep.subr.mxu0 0.0
    %1301 = vmatpush1.msra.mxu0 0.0
    %1302 = vmatprep.subr.mxu0 0.0
    %1303 = vmatpush1.msra.mxu0 0.0
    %1304 = vmatprep.subr.mxu0 0.0
    %1305 = vmatpush1.msra.mxu0 0.0
    %1306 = vmatprep.subr.mxu0 0.0
    %1307 = vmatpush1.msra.mxu0 0.0
    %1308 = vmatprep.subr.mxu0 0.0
    %1309 = vmatpush1.msra.mxu0 0.0
    %1310 = vmatprep.subr.mxu0 0.0
    %1311 = vmatpush1.msra.mxu0 0.0
    %1312 = vmatprep.subr.mxu0 0.0
    %1313 = vmatpush1.msra.mxu0 0.0
    %1314 = vmatprep.subr.mxu0 0.0
    %1315 = vmatpush1.msra.mxu0 0.0
    %1316 = vmatprep.subr.mxu0 0.0
    %1317 = vmatpush1.msra.mxu0 0.0
    %1318 = vmatprep.subr.mxu0 0.0
    %1319 = vmatpush1.msra.mxu0 0.0
    %1320 = vmatprep.subr.mxu0 0.0
    %1321 = vmatpush1.msra.mxu0 0.0
    %1322 = vmatprep.subr.mxu0 0.0
    %1323 = vmatpush1.msra.mxu0 0.0
    %1324 = vmatprep.subr.mxu0 0.0
    %1325 = vmatpush1.msra.mxu0 0.0
    %1326 = vmatprep.subr.mxu0 0.0
    %1327 = vmatpush1.msra.mxu0 0.0
    %1328 = vmatprep.subr.mxu0 0.0
    %1329 = vmatpush1.msra.mxu0 0.0
    %1330 = vmatprep.subr.mxu0 0.0
    %1331 = vmatpush1.msra.mxu0 0.0
    %1332 = vmatprep.subr.mxu0 0.0
    %1333 = vmatpush1.msra.mxu0 0.0
    %1334 = vmatprep.subr.mxu0 0.0
    %1335 = vmatpush1.msra.mxu0 0.0
    %1336 = vmatprep.subr.mxu0 0.0
    %1337 = vmatpush1.msra.mxu0 0.0
    %1338 = vmatprep.subr.mxu0 0.0
    %1339 = vmatpush1.msra.mxu0 0.0
    %1340 = vmatprep.subr.mxu0 0.0
    %1341 = vmatpush1.msra.mxu0 0.0
    %1342 = vmatprep.subr.mxu0 0.0
    %1343 = vmatpush1.msra.mxu0 0.0
    %1344 = vmatprep.subr.mxu0 0.0
    %1345 = vmatpush1.msra.mxu0 0.0
    %1346 = vmatprep.subr.mxu0 0.0
    %1347 = vmatpush1.msra.mxu0 0.0
    %1348 = vmatprep.mubr.f32.mxu0 0.0
    %1349 = vmatmul.mubr.f32.gmra.mrb[0].mxu0 %v1279
    %v1350 = vpop.f32.mrb[0].mxu0
    %v1351 = vadd.f32 %v1277, %v1350
    %v1352 = vpop.f32.mrb[0].mxu0
    %1353 = vmatprep.mubr.f32.mxu0 0.0
    %1354 = vmatmul.mubr.f32.gmra.mrb[0].mxu0 %v1282
    %v1355 = vpop.f32.mrb[0].mxu0
    %v1356 = vadd.f32 %v1277, %v1355
    %v1357 = vpop.f32.mrb[0].mxu0
    %1358 = vdwg.mxu0
    %1359 = vmatprep.subr.mxu0 0.0
    %1360 = vmatpush1.msra.mxu0 %v1269
    %1361 = vmatprep.subr.mxu0 0.0
    %1362 = vmatpush1.msra.mxu0 %v1270
    %1363 = vmatprep.subr.mxu0 0.0
    %1364 = vmatpush1.msra.mxu0 %v1271
    %1365 = vmatprep.subr.mxu0 0.0
    %1366 = vmatpush1.msra.mxu0 %v1272
    %1367 = vmatprep.subr.mxu0 0.0
    %1368 = vmatpush1.msra.mxu0 0.0
    %1369 = vmatprep.subr.mxu0 0.0
    %1370 = vmatpush1.msra.mxu0 0.0
    %1371 = vmatprep.subr.mxu0 0.0
    %1372 = vmatpush1.msra.mxu0 0.0
    %1373 = vmatprep.subr.mxu0 0.0
    %1374 = vmatpush1.msra.mxu0 0.0
    %1375 = vmatprep.subr.mxu0 0.0
    %1376 = vmatpush1.msra.mxu0 0.0
    %1377 = vmatprep.subr.mxu0 0.0
    %1378 = vmatpush1.msra.mxu0 0.0
    %1379 = vmatprep.subr.mxu0 0.0
    %1380 = vmatpush1.msra.mxu0 0.0
    %1381 = vmatprep.subr.mxu0 0.0
    %1382 = vmatpush1.msra.mxu0 0.0
    %1383 = vmatprep.subr.mxu0 0.0
    %1384 = vmatpush1.msra.mxu0 0.0
    %1385 = vmatprep.subr.mxu0 0.0
    %1386 = vmatpush1.msra.mxu0 0.0
    %1387 = vmatprep.subr.mxu0 0.0
    %1388 = vmatpush1.msra.mxu0 0.0
    %1389 = vmatprep.subr.mxu0 0.0
    %1390 = vmatpush1.msra.mxu0 0.0
    %1391 = vmatprep.subr.mxu0 0.0
    %1392 = vmatpush1.msra.mxu0 0.0
    %1393 = vmatprep.subr.mxu0 0.0
    %1394 = vmatpush1.msra.mxu0 0.0
    %1395 = vmatprep.subr.mxu0 0.0
    %1396 = vmatpush1.msra.mxu0 0.0
    %1397 = vmatprep.subr.mxu0 0.0
    %1398 = vmatpush1.msra.mxu0 0.0
    %1399 = vmatprep.subr.mxu0 0.0
    %1400 = vmatpush1.msra.mxu0 0.0
    %1401 = vmatprep.subr.mxu0 0.0
    %1402 = vmatpush1.msra.mxu0 0.0
    %1403 = vmatprep.subr.mxu0 0.0
    %1404 = vmatpush1.msra.mxu0 0.0
    %1405 = vmatprep.subr.mxu0 0.0
    %1406 = vmatpush1.msra.mxu0 0.0
    %1407 = vmatprep.subr.mxu0 0.0
    %1408 = vmatpush1.msra.mxu0 0.0
    %1409 = vmatprep.subr.mxu0 0.0
    %1410 = vmatpush1.msra.mxu0 0.0
    %1411 = vmatprep.subr.mxu0 0.0
    %1412 = vmatpush1.msra.mxu0 0.0
    %1413 = vmatprep.subr.mxu0 0.0
    %1414 = vmatpush1.msra.mxu0 0.0
    %1415 = vmatprep.subr.mxu0 0.0
    %1416 = vmatpush1.msra.mxu0 0.0
    %1417 = vmatprep.subr.mxu0 0.0
    %1418 = vmatpush1.msra.mxu0 0.0
    %1419 = vmatprep.subr.mxu0 0.0
    %1420 = vmatpush1.msra.mxu0 0.0
    %1421 = vmatprep.subr.mxu0 0.0
    %1422 = vmatpush1.msra.mxu0 0.0
    %1423 = vmatprep.mubr.f32.mxu0 0.0
    %1424 = vmatmul.mubr.f32.gmra.mrb[0].mxu0 %v381
    %v1425 = vpop.f32.mrb[0].mxu0
    %v1426 = vadd.f32 0.0, %v1425
    %v1427 = vpop.f32.mrb[0].mxu0
    %1428 = vdwg.mxu0
    %v1429 = vadd.f32 %v1351, %v1426
    %v1430 = vxor.u32 %v1429, 2147483648
    %v1431 = vmul.f32 %v1430, 1.442695
    %v1432 = vpow.pop %v1431
    %v1433 = vadd.f32 %v1432, 1.0
    %v1434 = vrcp.pop %v1433
    %v1435 = vmul.f32 1.0, %v1434
    %v1436 = vtanh.pop %v1429
    %v1437 = vsel %vm280, %v1435, %v1436
    %v1438 = vmul.f32 %v1437, 0.0
    %1440 = vrot.lane.b32.xlu0 %v1437, 32
    %v1441 = vpop.permute.xlu0 %1440
    %v1443 = vmul.f32 %v1437, %v1441
    %1445 = vrot.lane.b32.xlu0 %v1443, 32
    %v1446 = vpop.permute.xlu0 %1445
    %v1448 = vadd.f32 %v1438, %v1446
    %v1449 = vtanh.pop %v1448
    %1451 = vrot.lane.b32.xlu0 %v1449, 32
    %v1452 = vpop.permute.xlu0 %1451
    %v1454 = vmul.f32 %v1437, %v1452
    %1456 = vrot.lane.b32.xlu0 %v1454, 64
    %v1457 = vpop.permute.xlu0 %1456
    %1459 = vst.msk [vmem:[#allocation3] sm:$0x3] %vm483, %v1457
    %v1460 = vsel %vm379, %v1457, 0
    %1462 = vmatprep.subr.mxu0 0.0
    %1463 = vmatpush1.msra.mxu0 %v1269
    %1464 = vmatprep.subr.mxu0 0.0
    %1465 = vmatpush1.msra.mxu0 %v1270
    %1466 = vmatprep.subr.mxu0 0.0
    %1467 = vmatpush1.msra.mxu0 %v1271
    %1468 = vmatprep.subr.mxu0 0.0
    %1469 = vmatpush1.msra.mxu0 %v1272
    %1470 = vmatprep.subr.mxu0 0.0
    %1471 = vmatpush1.msra.mxu0 0.0
    %1472 = vmatprep.subr.mxu0 0.0
    %1473 = vmatpush1.msra.mxu0 0.0
    %1474 = vmatprep.subr.mxu0 0.0
    %1475 = vmatpush1.msra.mxu0 0.0
    %1476 = vmatprep.subr.mxu0 0.0
    %1477 = vmatpush1.msra.mxu0 0.0
    %1478 = vmatprep.subr.mxu0 0.0
    %1479 = vmatpush1.msra.mxu0 0.0
    %1480 = vmatprep.subr.mxu0 0.0
    %1481 = vmatpush1.msra.mxu0 0.0
    %1482 = vmatprep.subr.mxu0 0.0
    %1483 = vmatpush1.msra.mxu0 0.0
    %1484 = vmatprep.subr.mxu0 0.0
    %1485 = vmatpush1.msra.mxu0 0.0
    %1486 = vmatprep.subr.mxu0 0.0
    %1487 = vmatpush1.msra.mxu0 0.0
    %1488 = vmatprep.subr.mxu0 0.0
    %1489 = vmatpush1.msra.mxu0 0.0
    %1490 = vmatprep.subr.mxu0 0.0
    %1491 = vmatpush1.msra.mxu0 0.0
    %1492 = vmatprep.subr.mxu0 0.0
    %1493 = vmatpush1.msra.mxu0 0.0
    %1494 = vmatprep.subr.mxu0 0.0
    %1495 = vmatpush1.msra.mxu0 0.0
    %1496 = vmatprep.subr.mxu0 0.0
    %1497 = vmatpush1.msra.mxu0 0.0
    %1498 = vmatprep.subr.mxu0 0.0
    %1499 = vmatpush1.msra.mxu0 0.0
    %1500 = vmatprep.subr.mxu0 0.0
    %1501 = vmatpush1.msra.mxu0 0.0
    %1502 = vmatprep.subr.mxu0 0.0
    %1503 = vmatpush1.msra.mxu0 0.0
    %1504 = vmatprep.subr.mxu0 0.0
    %1505 = vmatpush1.msra.mxu0 0.0
    %1506 = vmatprep.subr.mxu0 0.0
    %1507 = vmatpush1.msra.mxu0 0.0
    %1508 = vmatprep.subr.mxu0 0.0
    %1509 = vmatpush1.msra.mxu0 0.0
    %1510 = vmatprep.subr.mxu0 0.0
    %1511 = vmatpush1.msra.mxu0 0.0
    %1512 = vmatprep.subr.mxu0 0.0
    %1513 = vmatpush1.msra.mxu0 0.0
    %1514 = vmatprep.subr.mxu0 0.0
    %1515 = vmatpush1.msra.mxu0 0.0
    %1516 = vmatprep.subr.mxu0 0.0
    %1517 = vmatpush1.msra.mxu0 0.0
    %1518 = vmatprep.subr.mxu0 0.0
    %1519 = vmatpush1.msra.mxu0 0.0
    %1520 = vmatprep.subr.mxu0 0.0
    %1521 = vmatpush1.msra.mxu0 0.0
    %1522 = vmatprep.subr.mxu0 0.0
    %1523 = vmatpush1.msra.mxu0 0.0
    %1524 = vmatprep.subr.mxu0 0.0
    %1525 = vmatpush1.msra.mxu0 0.0
    %1526 = vmatprep.mubr.f32.mxu0 0.0
    %1527 = vmatmul.mubr.f32.gmra.mrb[0].mxu0 %v1460
    %v1528 = vpop.f32.mrb[0].mxu0
    %v1529 = vadd.f32 0.0, %v1528
    %v1530 = vpop.f32.mrb[0].mxu0
    %1531 = vdwg.mxu0
    %v1533 = vrot.slane %v1529, 6
    %v1535 = vadd.f32 %v1351, %v1533
    %v1536 = vxor.u32 %v1535, 2147483648
    %v1537 = vmul.f32 %v1536, 1.442695
    %v1538 = vpow.pop %v1537
    %v1539 = vadd.f32 %v1538, 1.0
    %v1540 = vrcp.pop %v1539
    %v1541 = vmul.f32 1.0, %v1540
    %v1542 = vtanh.pop %v1535
    %v1543 = vsel %vm280, %v1541, %v1542
    %v1545 = vrot.slane %v1448, 6
    %v1547 = vmul.f32 %v1543, %v1545
    %1549 = vrot.lane.b32.xlu0 %v1543, 32
    %v1550 = vpop.permute.xlu0 %1549
    %v1552 = vmul.f32 %v1543, %v1550
    %1554 = vrot.lane.b32.xlu0 %v1552, 32
    %v1555 = vpop.permute.xlu0 %1554
    %v1557 = vadd.f32 %v1547, %v1555
    %v1558 = vtanh.pop %v1557
    %1560 = vrot.lane.b32.xlu0 %v1558, 32
    %v1561 = vpop.permute.xlu0 %1560
    %v1563 = vmul.f32 %v1543, %v1561
    %1565 = vrot.lane.b32.xlu0 %v1563, 64
    %v1566 = vpop.permute.xlu0 %1565
    %1568 = vst.msk [vmem:[#allocation3] sm:$0xc] %vm593, %v1566
    %v1569 = vrot.slane %v1563, 2
    %1570 = vrot.lane.b32.xlu0 %v1569, 64
    %v1571 = vpop.permute.xlu0 %1570
    %v1572 = vsel %vm379, %v1571, 0
    %1574 = vmatprep.subr.mxu0 0.0
    %1575 = vmatpush1.msra.mxu0 %v1269
    %1576 = vmatprep.subr.mxu0 0.0
    %1577 = vmatpush1.msra.mxu0 %v1270
    %1578 = vmatprep.subr.mxu0 0.0
    %1579 = vmatpush1.msra.mxu0 %v1271
    %1580 = vmatprep.subr.mxu0 0.0
    %1581 = vmatpush1.msra.mxu0 %v1272
    %1582 = vmatprep.subr.mxu0 0.0
    %1583 = vmatpush1.msra.mxu0 0.0
    %1584 = vmatprep.subr.mxu0 0.0
    %1585 = vmatpush1.msra.mxu0 0.0
    %1586 = vmatprep.subr.mxu0 0.0
    %1587 = vmatpush1.msra.mxu0 0.0
    %1588 = vmatprep.subr.mxu0 0.0
    %1589 = vmatpush1.msra.mxu0 0.0
    %1590 = vmatprep.subr.mxu0 0.0
    %1591 = vmatpush1.msra.mxu0 0.0
    %1592 = vmatprep.subr.mxu0 0.0
    %1593 = vmatpush1.msra.mxu0 0.0
    %1594 = vmatprep.subr.mxu0 0.0
    %1595 = vmatpush1.msra.mxu0 0.0
    %1596 = vmatprep.subr.mxu0 0.0
    %1597 = vmatpush1.msra.mxu0 0.0
    %1598 = vmatprep.subr.mxu0 0.0
    %1599 = vmatpush1.msra.mxu0 0.0
    %1600 = vmatprep.subr.mxu0 0.0
    %1601 = vmatpush1.msra.mxu0 0.0
    %1602 = vmatprep.subr.mxu0 0.0
    %1603 = vmatpush1.msra.mxu0 0.0
    %1604 = vmatprep.subr.mxu0 0.0
    %1605 = vmatpush1.msra.mxu0 0.0
    %1606 = vmatprep.subr.mxu0 0.0
    %1607 = vmatpush1.msra.mxu0 0.0
    %1608 = vmatprep.subr.mxu0 0.0
    %1609 = vmatpush1.msra.mxu0 0.0
    %1610 = vmatprep.subr.mxu0 0.0
    %1611 = vmatpush1.msra.mxu0 0.0
    %1612 = vmatprep.subr.mxu0 0.0
    %1613 = vmatpush1.msra.mxu0 0.0
    %1614 = vmatprep.subr.mxu0 0.0
    %1615 = vmatpush1.msra.mxu0 0.0
    %1616 = vmatprep.subr.mxu0 0.0
    %1617 = vmatpush1.msra.mxu0 0.0
    %1618 = vmatprep.subr.mxu0 0.0
    %1619 = vmatpush1.msra.mxu0 0.0
    %1620 = vmatprep.subr.mxu0 0.0
    %1621 = vmatpush1.msra.mxu0 0.0
    %1622 = vmatprep.subr.mxu0 0.0
    %1623 = vmatpush1.msra.mxu0 0.0
    %1624 = vmatprep.subr.mxu0 0.0
    %1625 = vmatpush1.msra.mxu0 0.0
    %1626 = vmatprep.subr.mxu0 0.0
    %1627 = vmatpush1.msra.mxu0 0.0
    %1628 = vmatprep.subr.mxu0 0.0
    %1629 = vmatpush1.msra.mxu0 0.0
    %1630 = vmatprep.subr.mxu0 0.0
    %1631 = vmatpush1.msra.mxu0 0.0
    %1632 = vmatprep.subr.mxu0 0.0
    %1633 = vmatpush1.msra.mxu0 0.0
    %1634 = vmatprep.subr.mxu0 0.0
    %1635 = vmatpush1.msra.mxu0 0.0
    %1636 = vmatprep.subr.mxu0 0.0
    %1637 = vmatpush1.msra.mxu0 0.0
    %1638 = vmatprep.mubr.f32.mxu0 0.0
    %1639 = vmatmul.mubr.f32.gmra.mrb[0].mxu0 %v1572
    %v1640 = vpop.f32.mrb[0].mxu0
    %v1641 = vadd.f32 0.0, %v1640
    %v1642 = vpop.f32.mrb[0].mxu0
    %1643 = vdwg.mxu0
    %v1645 = vrot.slane %v1641, 4
    %v1647 = vadd.f32 %v1351, %v1645
    %v1648 = vxor.u32 %v1647, 2147483648
    %v1649 = vmul.f32 %v1648, 1.442695
    %v1650 = vpow.pop %v1649
    %v1651 = vadd.f32 %v1650, 1.0
    %v1652 = vrcp.pop %v1651
    %v1653 = vmul.f32 1.0, %v1652
    %v1654 = vtanh.pop %v1647
    %v1655 = vsel %vm280, %v1653, %v1654
    %v1657 = vrot.slane %v1557, 6
    %v1659 = vmul.f32 %v1655, %v1657
    %1661 = vrot.lane.b32.xlu0 %v1655, 32
    %v1662 = vpop.permute.xlu0 %1661
    %v1664 = vmul.f32 %v1655, %v1662
    %1666 = vrot.lane.b32.xlu0 %v1664, 32
    %v1667 = vpop.permute.xlu0 %1666
    %v1669 = vadd.f32 %v1659, %v1667
    %v1670 = vtanh.pop %v1669
    %1672 = vrot.lane.b32.xlu0 %v1670, 32
    %v1673 = vpop.permute.xlu0 %1672
    %v1675 = vmul.f32 %v1655, %v1673
    %1677 = vrot.lane.b32.xlu0 %v1675, 64
    %v1678 = vpop.permute.xlu0 %1677
    %1680 = vst.msk [vmem:[#allocation3] sm:$0x30] %vm706, %v1678
    %v1681 = vrot.slane %v1675, 4
    %1682 = vrot.lane.b32.xlu0 %v1681, 64
    %v1683 = vpop.permute.xlu0 %1682
    %v1684 = vsel %vm379, %v1683, 0
    %1686 = vmatprep.subr.mxu0 0.0
    %1687 = vmatpush1.msra.mxu0 %v1269
    %1688 = vmatprep.subr.mxu0 0.0
    %1689 = vmatpush1.msra.mxu0 %v1270
    %1690 = vmatprep.subr.mxu0 0.0
    %1691 = vmatpush1.msra.mxu0 %v1271
    %1692 = vmatprep.subr.mxu0 0.0
    %1693 = vmatpush1.msra.mxu0 %v1272
    %1694 = vmatprep.subr.mxu0 0.0
    %1695 = vmatpush1.msra.mxu0 0.0
    %1696 = vmatprep.subr.mxu0 0.0
    %1697 = vmatpush1.msra.mxu0 0.0
    %1698 = vmatprep.subr.mxu0 0.0
    %1699 = vmatpush1.msra.mxu0 0.0
    %1700 = vmatprep.subr.mxu0 0.0
    %1701 = vmatpush1.msra.mxu0 0.0
    %1702 = vmatprep.subr.mxu0 0.0
    %1703 = vmatpush1.msra.mxu0 0.0
    %1704 = vmatprep.subr.mxu0 0.0
    %1705 = vmatpush1.msra.mxu0 0.0
    %1706 = vmatprep.subr.mxu0 0.0
    %1707 = vmatpush1.msra.mxu0 0.0
    %1708 = vmatprep.subr.mxu0 0.0
    %1709 = vmatpush1.msra.mxu0 0.0
    %1710 = vmatprep.subr.mxu0 0.0
    %1711 = vmatpush1.msra.mxu0 0.0
    %1712 = vmatprep.subr.mxu0 0.0
    %1713 = vmatpush1.msra.mxu0 0.0
    %1714 = vmatprep.subr.mxu0 0.0
    %1715 = vmatpush1.msra.mxu0 0.0
    %1716 = vmatprep.subr.mxu0 0.0
    %1717 = vmatpush1.msra.mxu0 0.0
    %1718 = vmatprep.subr.mxu0 0.0
    %1719 = vmatpush1.msra.mxu0 0.0
    %1720 = vmatprep.subr.mxu0 0.0
    %1721 = vmatpush1.msra.mxu0 0.0
    %1722 = vmatprep.subr.mxu0 0.0
    %1723 = vmatpush1.msra.mxu0 0.0
    %1724 = vmatprep.subr.mxu0 0.0
    %1725 = vmatpush1.msra.mxu0 0.0
    %1726 = vmatprep.subr.mxu0 0.0
    %1727 = vmatpush1.msra.mxu0 0.0
    %1728 = vmatprep.subr.mxu0 0.0
    %1729 = vmatpush1.msra.mxu0 0.0
    %1730 = vmatprep.subr.mxu0 0.0
    %1731 = vmatpush1.msra.mxu0 0.0
    %1732 = vmatprep.subr.mxu0 0.0
    %1733 = vmatpush1.msra.mxu0 0.0
    %1734 = vmatprep.subr.mxu0 0.0
    %1735 = vmatpush1.msra.mxu0 0.0
    %1736 = vmatprep.subr.mxu0 0.0
    %1737 = vmatpush1.msra.mxu0 0.0
    %1738 = vmatprep.subr.mxu0 0.0
    %1739 = vmatpush1.msra.mxu0 0.0
    %1740 = vmatprep.subr.mxu0 0.0
    %1741 = vmatpush1.msra.mxu0 0.0
    %1742 = vmatprep.subr.mxu0 0.0
    %1743 = vmatpush1.msra.mxu0 0.0
    %1744 = vmatprep.subr.mxu0 0.0
    %1745 = vmatpush1.msra.mxu0 0.0
    %1746 = vmatprep.subr.mxu0 0.0
    %1747 = vmatpush1.msra.mxu0 0.0
    %1748 = vmatprep.subr.mxu0 0.0
    %1749 = vmatpush1.msra.mxu0 0.0
    %1750 = vmatprep.mubr.f32.mxu0 0.0
    %1751 = vmatmul.mubr.f32.gmra.mrb[0].mxu0 %v1684
    %v1752 = vpop.f32.mrb[0].mxu0
    %v1753 = vadd.f32 0.0, %v1752
    %v1754 = vpop.f32.mrb[0].mxu0
    %1755 = vdwg.mxu0
    %v1757 = vrot.slane %v1753, 2
    %v1759 = vadd.f32 %v1351, %v1757
    %v1760 = vxor.u32 %v1759, 2147483648
    %v1761 = vmul.f32 %v1760, 1.442695
    %v1762 = vpow.pop %v1761
    %v1763 = vadd.f32 %v1762, 1.0
    %v1764 = vrcp.pop %v1763
    %v1765 = vmul.f32 1.0, %v1764
    %v1766 = vtanh.pop %v1759
    %v1767 = vsel %vm280, %v1765, %v1766
    %v1769 = vrot.slane %v1669, 6
    %v1771 = vmul.f32 %v1767, %v1769
    %1773 = vrot.lane.b32.xlu0 %v1767, 32
    %v1774 = vpop.permute.xlu0 %1773
    %v1776 = vmul.f32 %v1767, %v1774
    %1778 = vrot.lane.b32.xlu0 %v1776, 32
    %v1779 = vpop.permute.xlu0 %1778
    %v1781 = vadd.f32 %v1771, %v1779
    %v1782 = vtanh.pop %v1781
    %1784 = vrot.lane.b32.xlu0 %v1782, 32
    %v1785 = vpop.permute.xlu0 %1784
    %v1787 = vmul.f32 %v1767, %v1785
    %1789 = vrot.lane.b32.xlu0 %v1787, 64
    %v1790 = vpop.permute.xlu0 %1789
    %1792 = vst.msk [vmem:[#allocation3] sm:$0xc0] %vm819, %v1790
    %v1793 = vrot.slane %v1787, 6
    %1794 = vrot.lane.b32.xlu0 %v1793, 64
    %v1795 = vpop.permute.xlu0 %1794
    %v1796 = vsel %vm379, %v1795, 0
    %1798 = vmatprep.subr.mxu0 0.0
    %1799 = vmatpush1.msra.mxu0 %v1269
    %1800 = vmatprep.subr.mxu0 0.0
    %1801 = vmatpush1.msra.mxu0 %v1270
    %1802 = vmatprep.subr.mxu0 0.0
    %1803 = vmatpush1.msra.mxu0 %v1271
    %1804 = vmatprep.subr.mxu0 0.0
    %1805 = vmatpush1.msra.mxu0 %v1272
    %1806 = vmatprep.subr.mxu0 0.0
    %1807 = vmatpush1.msra.mxu0 0.0
    %1808 = vmatprep.subr.mxu0 0.0
    %1809 = vmatpush1.msra.mxu0 0.0
    %1810 = vmatprep.subr.mxu0 0.0
    %1811 = vmatpush1.msra.mxu0 0.0
    %1812 = vmatprep.subr.mxu0 0.0
    %1813 = vmatpush1.msra.mxu0 0.0
    %1814 = vmatprep.subr.mxu0 0.0
    %1815 = vmatpush1.msra.mxu0 0.0
    %1816 = vmatprep.subr.mxu0 0.0
    %1817 = vmatpush1.msra.mxu0 0.0
    %1818 = vmatprep.subr.mxu0 0.0
    %1819 = vmatpush1.msra.mxu0 0.0
    %1820 = vmatprep.subr.mxu0 0.0
    %1821 = vmatpush1.msra.mxu0 0.0
    %1822 = vmatprep.subr.mxu0 0.0
    %1823 = vmatpush1.msra.mxu0 0.0
    %1824 = vmatprep.subr.mxu0 0.0
    %1825 = vmatpush1.msra.mxu0 0.0
    %1826 = vmatprep.subr.mxu0 0.0
    %1827 = vmatpush1.msra.mxu0 0.0
    %1828 = vmatprep.subr.mxu0 0.0
    %1829 = vmatpush1.msra.mxu0 0.0
    %1830 = vmatprep.subr.mxu0 0.0
    %1831 = vmatpush1.msra.mxu0 0.0
    %1832 = vmatprep.subr.mxu0 0.0
    %1833 = vmatpush1.msra.mxu0 0.0
    %1834 = vmatprep.subr.mxu0 0.0
    %1835 = vmatpush1.msra.mxu0 0.0
    %1836 = vmatprep.subr.mxu0 0.0
    %1837 = vmatpush1.msra.mxu0 0.0
    %1838 = vmatprep.subr.mxu0 0.0
    %1839 = vmatpush1.msra.mxu0 0.0
    %1840 = vmatprep.subr.mxu0 0.0
    %1841 = vmatpush1.msra.mxu0 0.0
    %1842 = vmatprep.subr.mxu0 0.0
    %1843 = vmatpush1.msra.mxu0 0.0
    %1844 = vmatprep.subr.mxu0 0.0
    %1845 = vmatpush1.msra.mxu0 0.0
    %1846 = vmatprep.subr.mxu0 0.0
    %1847 = vmatpush1.msra.mxu0 0.0
    %1848 = vmatprep.subr.mxu0 0.0
    %1849 = vmatpush1.msra.mxu0 0.0
    %1850 = vmatprep.subr.mxu0 0.0
    %1851 = vmatpush1.msra.mxu0 0.0
    %1852 = vmatprep.subr.mxu0 0.0
    %1853 = vmatpush1.msra.mxu0 0.0
    %1854 = vmatprep.subr.mxu0 0.0
    %1855 = vmatpush1.msra.mxu0 0.0
    %1856 = vmatprep.subr.mxu0 0.0
    %1857 = vmatpush1.msra.mxu0 0.0
    %1858 = vmatprep.subr.mxu0 0.0
    %1859 = vmatpush1.msra.mxu0 0.0
    %1860 = vmatprep.subr.mxu0 0.0
    %1861 = vmatpush1.msra.mxu0 0.0
    %1862 = vmatprep.mubr.f32.mxu0 0.0
    %1863 = vmatmul.mubr.f32.gmra.mrb[0].mxu0 %v1796
    %v1864 = vpop.f32.mrb[0].mxu0
    %v1865 = vadd.f32 0.0, %v1864
    %v1866 = vpop.f32.mrb[0].mxu0
    %1867 = vdwg.mxu0
    %v1868 = vadd.f32 %v1356, %v1865
    %v1869 = vxor.u32 %v1868, 2147483648
    %v1870 = vmul.f32 %v1869, 1.442695
    %v1871 = vpow.pop %v1870
    %v1872 = vadd.f32 %v1871, 1.0
    %v1873 = vrcp.pop %v1872
    %v1874 = vmul.f32 1.0, %v1873
    %v1875 = vtanh.pop %v1868
    %v1876 = vsel %vm280, %v1874, %v1875
    %v1878 = vrot.slane %v1781, 6
    %v1880 = vmul.f32 %v1876, %v1878
    %1882 = vrot.lane.b32.xlu0 %v1876, 32
    %v1883 = vpop.permute.xlu0 %1882
    %v1885 = vmul.f32 %v1876, %v1883
    %1887 = vrot.lane.b32.xlu0 %v1885, 32
    %v1888 = vpop.permute.xlu0 %1887
    %v1890 = vadd.f32 %v1880, %v1888
    %v1891 = vtanh.pop %v1890
    %1893 = vrot.lane.b32.xlu0 %v1891, 32
    %v1894 = vpop.permute.xlu0 %1893
    %v1896 = vmul.f32 %v1876, %v1894
    %1898 = vrot.lane.b32.xlu0 %v1896, 64
    %v1899 = vpop.permute.xlu0 %1898
    %1901 = vst.msk [vmem:[#allocation3 + $0x8] sm:$0x3] %vm483, %v1899
    %v1902 = vsel %vm379, %v1899, 0
    %1904 = vmatprep.subr.mxu0 0.0
    %1905 = vmatpush1.msra.mxu0 %v1269
    %1906 = vmatprep.subr.mxu0 0.0
    %1907 = vmatpush1.msra.mxu0 %v1270
    %1908 = vmatprep.subr.mxu0 0.0
    %1909 = vmatpush1.msra.mxu0 %v1271
    %1910 = vmatprep.subr.mxu0 0.0
    %1911 = vmatpush1.msra.mxu0 %v1272
    %1912 = vmatprep.subr.mxu0 0.0
    %1913 = vmatpush1.msra.mxu0 0.0
    %1914 = vmatprep.subr.mxu0 0.0
    %1915 = vmatpush1.msra.mxu0 0.0
    %1916 = vmatprep.subr.mxu0 0.0
    %1917 = vmatpush1.msra.mxu0 0.0
    %1918 = vmatprep.subr.mxu0 0.0
    %1919 = vmatpush1.msra.mxu0 0.0
    %1920 = vmatprep.subr.mxu0 0.0
    %1921 = vmatpush1.msra.mxu0 0.0
    %1922 = vmatprep.subr.mxu0 0.0
    %1923 = vmatpush1.msra.mxu0 0.0
    %1924 = vmatprep.subr.mxu0 0.0
    %1925 = vmatpush1.msra.mxu0 0.0
    %1926 = vmatprep.subr.mxu0 0.0
    %1927 = vmatpush1.msra.mxu0 0.0
    %1928 = vmatprep.subr.mxu0 0.0
    %1929 = vmatpush1.msra.mxu0 0.0
    %1930 = vmatprep.subr.mxu0 0.0
    %1931 = vmatpush1.msra.mxu0 0.0
    %1932 = vmatprep.subr.mxu0 0.0
    %1933 = vmatpush1.msra.mxu0 0.0
    %1934 = vmatprep.subr.mxu0 0.0
    %1935 = vmatpush1.msra.mxu0 0.0
    %1936 = vmatprep.subr.mxu0 0.0
    %1937 = vmatpush1.msra.mxu0 0.0
    %1938 = vmatprep.subr.mxu0 0.0
    %1939 = vmatpush1.msra.mxu0 0.0
    %1940 = vmatprep.subr.mxu0 0.0
    %1941 = vmatpush1.msra.mxu0 0.0
    %1942 = vmatprep.subr.mxu0 0.0
    %1943 = vmatpush1.msra.mxu0 0.0
    %1944 = vmatprep.subr.mxu0 0.0
    %1945 = vmatpush1.msra.mxu0 0.0
    %1946 = vmatprep.subr.mxu0 0.0
    %1947 = vmatpush1.msra.mxu0 0.0
    %1948 = vmatprep.subr.mxu0 0.0
    %1949 = vmatpush1.msra.mxu0 0.0
    %1950 = vmatprep.subr.mxu0 0.0
    %1951 = vmatpush1.msra.mxu0 0.0
    %1952 = vmatprep.subr.mxu0 0.0
    %1953 = vmatpush1.msra.mxu0 0.0
    %1954 = vmatprep.subr.mxu0 0.0
    %1955 = vmatpush1.msra.mxu0 0.0
    %1956 = vmatprep.subr.mxu0 0.0
    %1957 = vmatpush1.msra.mxu0 0.0
    %1958 = vmatprep.subr.mxu0 0.0
    %1959 = vmatpush1.msra.mxu0 0.0
    %1960 = vmatprep.subr.mxu0 0.0
    %1961 = vmatpush1.msra.mxu0 0.0
    %1962 = vmatprep.subr.mxu0 0.0
    %1963 = vmatpush1.msra.mxu0 0.0
    %1964 = vmatprep.subr.mxu0 0.0
    %1965 = vmatpush1.msra.mxu0 0.0
    %1966 = vmatprep.subr.mxu0 0.0
    %1967 = vmatpush1.msra.mxu0 0.0
    %1968 = vmatprep.mubr.f32.mxu0 0.0
    %1969 = vmatmul.mubr.f32.gmra.mrb[0].mxu0 %v1902
    %v1970 = vpop.f32.mrb[0].mxu0
    %v1971 = vadd.f32 0.0, %v1970
    %v1972 = vpop.f32.mrb[0].mxu0
    %1973 = vdwg.mxu0
    %v1975 = vrot.slane %v1971, 6
    %v1977 = vadd.f32 %v1356, %v1975
    %v1978 = vxor.u32 %v1977, 2147483648
    %v1979 = vmul.f32 %v1978, 1.442695
    %v1980 = vpow.pop %v1979
    %v1981 = vadd.f32 %v1980, 1.0
    %v1982 = vrcp.pop %v1981
    %v1983 = vmul.f32 1.0, %v1982
    %v1984 = vtanh.pop %v1977
    %v1985 = vsel %vm280, %v1983, %v1984
    %v1987 = vrot.slane %v1890, 6
    %v1989 = vmul.f32 %v1985, %v1987
    %1991 = vrot.lane.b32.xlu0 %v1985, 32
    %v1992 = vpop.permute.xlu0 %1991
    %v1994 = vmul.f32 %v1985, %v1992
    %1996 = vrot.lane.b32.xlu0 %v1994, 32
    %v1997 = vpop.permute.xlu0 %1996
    %v1999 = vadd.f32 %v1989, %v1997
    %v2000 = vtanh.pop %v1999
    %2002 = vrot.lane.b32.xlu0 %v2000, 32
    %v2003 = vpop.permute.xlu0 %2002
    %v2005 = vmul.f32 %v1985, %v2003
    %2007 = vrot.lane.b32.xlu0 %v2005, 64
    %v2008 = vpop.permute.xlu0 %2007
    %2010 = vst.msk [vmem:[#allocation3 + $0x8] sm:$0xc] %vm593, %v2008
    %v2011 = vrot.slane %v2005, 2
    %2012 = vrot.lane.b32.xlu0 %v2011, 64
    %v2013 = vpop.permute.xlu0 %2012
    %v2014 = vsel %vm379, %v2013, 0
    %2016 = vmatprep.subr.mxu0 0.0
    %2017 = vmatpush1.msra.mxu0 %v1269
    %2018 = vmatprep.subr.mxu0 0.0
    %2019 = vmatpush1.msra.mxu0 %v1270
    %2020 = vmatprep.subr.mxu0 0.0
    %2021 = vmatpush1.msra.mxu0 %v1271
    %2022 = vmatprep.subr.mxu0 0.0
    %2023 = vmatpush1.msra.mxu0 %v1272
    %2024 = vmatprep.subr.mxu0 0.0
    %2025 = vmatpush1.msra.mxu0 0.0
    %2026 = vmatprep.subr.mxu0 0.0
    %2027 = vmatpush1.msra.mxu0 0.0
    %2028 = vmatprep.subr.mxu0 0.0
    %2029 = vmatpush1.msra.mxu0 0.0
    %2030 = vmatprep.subr.mxu0 0.0
    %2031 = vmatpush1.msra.mxu0 0.0
    %2032 = vmatprep.subr.mxu0 0.0
    %2033 = vmatpush1.msra.mxu0 0.0
    %2034 = vmatprep.subr.mxu0 0.0
    %2035 = vmatpush1.msra.mxu0 0.0
    %2036 = vmatprep.subr.mxu0 0.0
    %2037 = vmatpush1.msra.mxu0 0.0
    %2038 = vmatprep.subr.mxu0 0.0
    %2039 = vmatpush1.msra.mxu0 0.0
    %2040 = vmatprep.subr.mxu0 0.0
    %2041 = vmatpush1.msra.mxu0 0.0
    %2042 = vmatprep.subr.mxu0 0.0
    %2043 = vmatpush1.msra.mxu0 0.0
    %2044 = vmatprep.subr.mxu0 0.0
    %2045 = vmatpush1.msra.mxu0 0.0
    %2046 = vmatprep.subr.mxu0 0.0
    %2047 = vmatpush1.msra.mxu0 0.0
    %2048 = vmatprep.subr.mxu0 0.0
    %2049 = vmatpush1.msra.mxu0 0.0
    %2050 = vmatprep.subr.mxu0 0.0
    %2051 = vmatpush1.msra.mxu0 0.0
    %2052 = vmatprep.subr.mxu0 0.0
    %2053 = vmatpush1.msra.mxu0 0.0
    %2054 = vmatprep.subr.mxu0 0.0
    %2055 = vmatpush1.msra.mxu0 0.0
    %2056 = vmatprep.subr.mxu0 0.0
    %2057 = vmatpush1.msra.mxu0 0.0
    %2058 = vmatprep.subr.mxu0 0.0
    %2059 = vmatpush1.msra.mxu0 0.0
    %2060 = vmatprep.subr.mxu0 0.0
    %2061 = vmatpush1.msra.mxu0 0.0
    %2062 = vmatprep.subr.mxu0 0.0
    %2063 = vmatpush1.msra.mxu0 0.0
    %2064 = vmatprep.subr.mxu0 0.0
    %2065 = vmatpush1.msra.mxu0 0.0
    %2066 = vmatprep.subr.mxu0 0.0
    %2067 = vmatpush1.msra.mxu0 0.0
    %2068 = vmatprep.subr.mxu0 0.0
    %2069 = vmatpush1.msra.mxu0 0.0
    %2070 = vmatprep.subr.mxu0 0.0
    %2071 = vmatpush1.msra.mxu0 0.0
    %2072 = vmatprep.subr.mxu0 0.0
    %2073 = vmatpush1.msra.mxu0 0.0
    %2074 = vmatprep.subr.mxu0 0.0
    %2075 = vmatpush1.msra.mxu0 0.0
    %2076 = vmatprep.subr.mxu0 0.0
    %2077 = vmatpush1.msra.mxu0 0.0
    %2078 = vmatprep.subr.mxu0 0.0
    %2079 = vmatpush1.msra.mxu0 0.0
    %2080 = vmatprep.mubr.f32.mxu0 0.0
    %2081 = vmatmul.mubr.f32.gmra.mrb[0].mxu0 %v2014
    %v2082 = vpop.f32.mrb[0].mxu0
    %v2083 = vadd.f32 0.0, %v2082
    %v2084 = vpop.f32.mrb[0].mxu0
    %2085 = vdwg.mxu0
    %v2087 = vrot.slane %v2083, 4
    %v2089 = vadd.f32 %v1356, %v2087
    %v2090 = vxor.u32 %v2089, 2147483648
    %v2091 = vmul.f32 %v2090, 1.442695
    %v2092 = vpow.pop %v2091
    %v2093 = vadd.f32 %v2092, 1.0
    %v2094 = vrcp.pop %v2093
    %v2095 = vmul.f32 1.0, %v2094
    %v2096 = vtanh.pop %v2089
    %v2097 = vsel %vm280, %v2095, %v2096
    %v2099 = vrot.slane %v1999, 6
    %v2101 = vmul.f32 %v2097, %v2099
    %2103 = vrot.lane.b32.xlu0 %v2097, 32
    %v2104 = vpop.permute.xlu0 %2103
    %v2106 = vmul.f32 %v2097, %v2104
    %2108 = vrot.lane.b32.xlu0 %v2106, 32
    %v2109 = vpop.permute.xlu0 %2108
    %v2111 = vadd.f32 %v2101, %v2109
    %v2112 = vtanh.pop %v2111
    %2114 = vrot.lane.b32.xlu0 %v2112, 32
    %v2115 = vpop.permute.xlu0 %2114
    %v2117 = vmul.f32 %v2097, %v2115
    %2119 = vrot.lane.b32.xlu0 %v2117, 64
    %v2120 = vpop.permute.xlu0 %2119
    %2122 = vst.msk [vmem:[#allocation3 + $0x8] sm:$0x30] %vm706, %v2120
    %v2123 = vrot.slane %v2117, 4
    %2124 = vrot.lane.b32.xlu0 %v2123, 64
    %v2125 = vpop.permute.xlu0 %2124
    %v2126 = vsel %vm379, %v2125, 0
    %2128 = vmatprep.subr.mxu0 0.0
    %2129 = vmatpush1.msra.mxu0 %v1269
    %2130 = vmatprep.subr.mxu0 0.0
    %2131 = vmatpush1.msra.mxu0 %v1270
    %2132 = vmatprep.subr.mxu0 0.0
    %2133 = vmatpush1.msra.mxu0 %v1271
    %2134 = vmatprep.subr.mxu0 0.0
    %2135 = vmatpush1.msra.mxu0 %v1272
    %2136 = vmatprep.subr.mxu0 0.0
    %2137 = vmatpush1.msra.mxu0 0.0
    %2138 = vmatprep.subr.mxu0 0.0
    %2139 = vmatpush1.msra.mxu0 0.0
    %2140 = vmatprep.subr.mxu0 0.0
    %2141 = vmatpush1.msra.mxu0 0.0
    %2142 = vmatprep.subr.mxu0 0.0
    %2143 = vmatpush1.msra.mxu0 0.0
    %2144 = vmatprep.subr.mxu0 0.0
    %2145 = vmatpush1.msra.mxu0 0.0
    %2146 = vmatprep.subr.mxu0 0.0
    %2147 = vmatpush1.msra.mxu0 0.0
    %2148 = vmatprep.subr.mxu0 0.0
    %2149 = vmatpush1.msra.mxu0 0.0
    %2150 = vmatprep.subr.mxu0 0.0
    %2151 = vmatpush1.msra.mxu0 0.0
    %2152 = vmatprep.subr.mxu0 0.0
    %2153 = vmatpush1.msra.mxu0 0.0
    %2154 = vmatprep.subr.mxu0 0.0
    %2155 = vmatpush1.msra.mxu0 0.0
    %2156 = vmatprep.subr.mxu0 0.0
    %2157 = vmatpush1.msra.mxu0 0.0
    %2158 = vmatprep.subr.mxu0 0.0
    %2159 = vmatpush1.msra.mxu0 0.0
    %2160 = vmatprep.subr.mxu0 0.0
    %2161 = vmatpush1.msra.mxu0 0.0
    %2162 = vmatprep.subr.mxu0 0.0
    %2163 = vmatpush1.msra.mxu0 0.0
    %2164 = vmatprep.subr.mxu0 0.0
    %2165 = vmatpush1.msra.mxu0 0.0
    %2166 = vmatprep.subr.mxu0 0.0
    %2167 = vmatpush1.msra.mxu0 0.0
    %2168 = vmatprep.subr.mxu0 0.0
    %2169 = vmatpush1.msra.mxu0 0.0
    %2170 = vmatprep.subr.mxu0 0.0
    %2171 = vmatpush1.msra.mxu0 0.0
    %2172 = vmatprep.subr.mxu0 0.0
    %2173 = vmatpush1.msra.mxu0 0.0
    %2174 = vmatprep.subr.mxu0 0.0
    %2175 = vmatpush1.msra.mxu0 0.0
    %2176 = vmatprep.subr.mxu0 0.0
    %2177 = vmatpush1.msra.mxu0 0.0
    %2178 = vmatprep.subr.mxu0 0.0
    %2179 = vmatpush1.msra.mxu0 0.0
    %2180 = vmatprep.subr.mxu0 0.0
    %2181 = vmatpush1.msra.mxu0 0.0
    %2182 = vmatprep.subr.mxu0 0.0
    %2183 = vmatpush1.msra.mxu0 0.0
    %2184 = vmatprep.subr.mxu0 0.0
    %2185 = vmatpush1.msra.mxu0 0.0
    %2186 = vmatprep.subr.mxu0 0.0
    %2187 = vmatpush1.msra.mxu0 0.0
    %2188 = vmatprep.subr.mxu0 0.0
    %2189 = vmatpush1.msra.mxu0 0.0
    %2190 = vmatprep.subr.mxu0 0.0
    %2191 = vmatpush1.msra.mxu0 0.0
    %2192 = vmatprep.mubr.f32.mxu0 0.0
    %2193 = vmatmul.mubr.f32.gmra.mrb[0].mxu0 %v2126
    %v2194 = vpop.f32.mrb[0].mxu0
    %v2195 = vadd.f32 0.0, %v2194
    %v2196 = vpop.f32.mrb[0].mxu0
    %2197 = vdwg.mxu0
    %v2199 = vrot.slane %v2195, 2
    %v2201 = vadd.f32 %v1356, %v2199
    %v2202 = vxor.u32 %v2201, 2147483648
    %v2203 = vmul.f32 %v2202, 1.442695
    %v2204 = vpow.pop %v2203
    %v2205 = vadd.f32 %v2204, 1.0
    %v2206 = vrcp.pop %v2205
    %v2207 = vmul.f32 1.0, %v2206
    %v2208 = vtanh.pop %v2201
    %v2209 = vsel %vm280, %v2207, %v2208
    %v2211 = vrot.slane %v2111, 6
    %v2213 = vmul.f32 %v2209, %v2211
    %2215 = vrot.lane.b32.xlu0 %v2209, 32
    %v2216 = vpop.permute.xlu0 %2215
    %v2218 = vmul.f32 %v2209, %v2216
    %2220 = vrot.lane.b32.xlu0 %v2218, 32
    %v2221 = vpop.permute.xlu0 %2220
    %v2223 = vadd.f32 %v2213, %v2221
    %v2224 = vtanh.pop %v2223
    %2226 = vrot.lane.b32.xlu0 %v2224, 32
    %v2227 = vpop.permute.xlu0 %2226
    %v2229 = vmul.f32 %v2209, %v2227
    %2231 = vrot.lane.b32.xlu0 %v2229, 64
    %v2232 = vpop.permute.xlu0 %2231
    %2234 = vst.msk [vmem:[#allocation3 + $0x8] sm:$0xc0] %vm819, %v2232
    %v2235 = vld [vmem:[#allocation4 + $0xb0] sm:$0xff]
    %v2236 = vld [vmem:[#allocation4 + $0xb8] sm:$0xff]
    %v2237 = vld [vmem:[#allocation4 + $0xc0] sm:$0xff]
    %v2238 = vld [vmem:[#allocation4 + $0xc8] sm:$0xff]
    %v2239 = vld [vmem:[#allocation4 + $0xd0] sm:$0x1]
    %v2240 = vld [vmem:[#allocation3] sm:$0xff]
    %v2241 = vld [vmem:[#allocation3 + $0x8] sm:$0xff]
    %v2242 = vlaneseq
    %v2243 = vshrl.u32 %v2242, 7
    %v2244 = vsub.s32 0, %v2243
    %v2245 = vrot.slane %v2239, %v2244
    %v2247 = vsel %vm379, %v2240, 0
    %v2250 = vsel %vm379, %v2241, 0
    %2252 = vmatprep.subr.mxu0 0.0
    %2253 = vmatpush1.msra.mxu0 %v2235
    %2254 = vmatprep.subr.mxu0 0.0
    %2255 = vmatpush1.msra.mxu0 %v2236
    %2256 = vmatprep.subr.mxu0 0.0
    %2257 = vmatpush1.msra.mxu0 %v2237
    %2258 = vmatprep.subr.mxu0 0.0
    %2259 = vmatpush1.msra.mxu0 %v2238
    %2260 = vmatprep.subr.mxu0 0.0
    %2261 = vmatpush1.msra.mxu0 0.0
    %2262 = vmatprep.subr.mxu0 0.0
    %2263 = vmatpush1.msra.mxu0 0.0
    %2264 = vmatprep.subr.mxu0 0.0
    %2265 = vmatpush1.msra.mxu0 0.0
    %2266 = vmatprep.subr.mxu0 0.0
    %2267 = vmatpush1.msra.mxu0 0.0
    %2268 = vmatprep.subr.mxu0 0.0
    %2269 = vmatpush1.msra.mxu0 0.0
    %2270 = vmatprep.subr.mxu0 0.0
    %2271 = vmatpush1.msra.mxu0 0.0
    %2272 = vmatprep.subr.mxu0 0.0
    %2273 = vmatpush1.msra.mxu0 0.0
    %2274 = vmatprep.subr.mxu0 0.0
    %2275 = vmatpush1.msra.mxu0 0.0
    %2276 = vmatprep.subr.mxu0 0.0
    %2277 = vmatpush1.msra.mxu0 0.0
    %2278 = vmatprep.subr.mxu0 0.0
    %2279 = vmatpush1.msra.mxu0 0.0
    %2280 = vmatprep.subr.mxu0 0.0
    %2281 = vmatpush1.msra.mxu0 0.0
    %2282 = vmatprep.subr.mxu0 0.0
    %2283 = vmatpush1.msra.mxu0 0.0
    %2284 = vmatprep.subr.mxu0 0.0
    %2285 = vmatpush1.msra.mxu0 0.0
    %2286 = vmatprep.subr.mxu0 0.0
    %2287 = vmatpush1.msra.mxu0 0.0
    %2288 = vmatprep.subr.mxu0 0.0
    %2289 = vmatpush1.msra.mxu0 0.0
    %2290 = vmatprep.subr.mxu0 0.0
    %2291 = vmatpush1.msra.mxu0 0.0
    %2292 = vmatprep.subr.mxu0 0.0
    %2293 = vmatpush1.msra.mxu0 0.0
    %2294 = vmatprep.subr.mxu0 0.0
    %2295 = vmatpush1.msra.mxu0 0.0
    %2296 = vmatprep.subr.mxu0 0.0
    %2297 = vmatpush1.msra.mxu0 0.0
    %2298 = vmatprep.subr.mxu0 0.0
    %2299 = vmatpush1.msra.mxu0 0.0
    %2300 = vmatprep.subr.mxu0 0.0
    %2301 = vmatpush1.msra.mxu0 0.0
    %2302 = vmatprep.subr.mxu0 0.0
    %2303 = vmatpush1.msra.mxu0 0.0
    %2304 = vmatprep.subr.mxu0 0.0
    %2305 = vmatpush1.msra.mxu0 0.0
    %2306 = vmatprep.subr.mxu0 0.0
    %2307 = vmatpush1.msra.mxu0 0.0
    %2308 = vmatprep.subr.mxu0 0.0
    %2309 = vmatpush1.msra.mxu0 0.0
    %2310 = vmatprep.subr.mxu0 0.0
    %2311 = vmatpush1.msra.mxu0 0.0
    %2312 = vmatprep.subr.mxu0 0.0
    %2313 = vmatpush1.msra.mxu0 0.0
    %2314 = vmatprep.subr.mxu0 0.0
    %2315 = vmatpush1.msra.mxu0 0.0
    %2316 = vmatprep.mubr.f32.mxu0 0.0
    %2317 = vmatmul.mubr.f32.gmra.mrb[0].mxu0 %v2247
    %v2318 = vpop.f32.mrb[0].mxu0
    %v2319 = vadd.f32 %v2245, %v2318
    %v2320 = vpop.f32.mrb[0].mxu0
    %2321 = vmatprep.mubr.f32.mxu0 0.0
    %2322 = vmatmul.mubr.f32.gmra.mrb[0].mxu0 %v2250
    %v2323 = vpop.f32.mrb[0].mxu0
    %v2324 = vadd.f32 %v2245, %v2323
    %v2325 = vpop.f32.mrb[0].mxu0
    %2326 = vdwg.mxu0
    %2327 = vst [vmem:[%s3] sm:$0xff] %v2319
    %2328 = vst [vmem:[%s3 + $0x8] sm:$0xff] %v2324
    %v2329 = vrot.slane %v1257, 6
    %v2331 = vrot.slane %v2229, 4
    %v2334 = vrot.slane %v1251, 2
    %2335 = vrot.lane.b32.xlu0 %v2334, 32
    %v2336 = vpop.permute.xlu0 %2335
    %2339 = vrot.lane.b32.xlu0 %v2223, 32
    %v2340 = vpop.permute.xlu0 %2339
    %vm2342 = vcmask 1041408
    %v2343 = vsel %vm2342, %v2329, %v2331
    %vm2344 = vcmask 1043456
    %v2345 = vsel %vm2344, %v2343, %v2336
    %vm2346 = vcmask 1045504
    %v2347 = vsel %vm2346, %v2345, %v2340
    %2349 = vrot.lane.b32.xlu0 %v2347, 64
    %v2350 = vpop.permute.xlu0 %2349
    %2352 = vst.msk [vmem:[%s3 + $0x10] sm:$0xff] %vm379, %v2350
    // Predicated region
    $region18: #{forward.1} parent=1 // pred_check
      _
    $region19: #{forward.1} parent=1 // pred_check_branch
      %2354 = sbr.rel (0) target = $region21
    $region20: #{forward.1} parent=1 // pred_region
      _
    $region21: #{forward.1} parent=1 // pred_fallthru
      _
    // Predicated region
    $region22: #{forward.1} parent=1 // pred_check
      _
    $region23: #{forward.1} parent=1 // pred_check_branch
      %2356 = sbr.rel (0) target = $region25
    $region24: #{forward.1} parent=1 // pred_region
      _
    $region25: #{forward.1} parent=1 // pred_fallthru
      _
    %2357 = vsyncpa [#allocation5], 1

</llo_original>
